<compile_context>
chip_gen: v6e
topology: v6e:2x2x1
jax: 0.10.0
libtpu: 0.0.40
codegen_flags: <defaults>
</compile_context>

<pallas_src>
import functools

import jax
import jax.numpy as jnp
from jax.experimental import pallas as pl
from jax.experimental.pallas import tpu as pltpu


def _round_up(x, m):
    return (x + m - 1) // m * m


def _node_to_edge_kernel(xa_ref, xb_ref,
                         w1a_ref, w1b_ref, b1_ref,
                         w2_ref, b2_ref, w3_ref, b3_ref,
                         out_ref, *, residual):
    """One batch tile: both concat orders stacked on the batch axis, shared-weight
    3-layer MLP on the MXU (bf16 operands, f32 accumulation)."""
    xa = xa_ref[...].astype(jnp.bfloat16)           # [bb, n_in]
    xb = xb_ref[...].astype(jnp.bfloat16)           # [bb, n_in]
    bb = xa.shape[0]

    # Rows 0..bb  correspond to the xab branch, rows bb..2bb to the xba branch.
    x_first = jnp.concatenate([xa, xb], axis=0)     # multiplies W1[:n_in]
    x_second = jnp.concatenate([xb, xa], axis=0)    # multiplies W1[n_in:]

    # linear_in + relu  (split-K layer 1: true K = n_in, no lane concat/pad)
    h = (jnp.dot(x_first, w1a_ref[...], preferred_element_type=jnp.float32)
         + jnp.dot(x_second, w1b_ref[...], preferred_element_type=jnp.float32)
         + b1_ref[...])
    h = jnp.maximum(h, 0.0)

    # linear_hidden + relu
    h = jnp.dot(h.astype(w2_ref.dtype), w2_ref[...],
                preferred_element_type=jnp.float32) + b2_ref[...]
    h = jnp.maximum(h, 0.0)

    # dropout(p=0.5): eval-mode identity (deterministic forward)

    # linear_out + relu
    y = jnp.dot(h.astype(w3_ref.dtype), w3_ref[...],
                preferred_element_type=jnp.float32) + b3_ref[...]
    y = jnp.maximum(y, 0.0)

    if residual:                                    # static python flag
        # residual input per row: rows 0..bb -> [xa, xb], rows bb..2bb -> [xb, xa]
        x_res = jnp.concatenate([x_first, x_second], axis=1).astype(jnp.float32)
        y = (x_res + y) * 0.5

    out_ref[...] = ((y[:bb] + y[bb:]) * 0.5).astype(out_ref.dtype)


def make_params(key, n_in, n_out, dtype=jnp.float32):
    """Deterministic parameter init mimicking nn.Linear's U(-1/sqrt(fan_in), ...)."""
    n_mlp_in = 2 * n_in
    n_hidden = int(round(2 * n_mlp_in))             # n_hidden_factor = 2
    ks = jax.random.split(key, 6)

    def lin(kw, kb, fan_in, fan_out):
        bound = 1.0 / (fan_in ** 0.5)
        w = jax.random.uniform(kw, (fan_in, fan_out), dtype, -bound, bound)
        b = jax.random.uniform(kb, (1, fan_out), dtype, -bound, bound)
        return w, b

    w1, b1 = lin(ks[0], ks[1], n_mlp_in, n_hidden)
    w2, b2 = lin(ks[2], ks[3], n_hidden, n_hidden)
    w3, b3 = lin(ks[4], ks[5], n_hidden, n_out)
    residual = (n_mlp_in == n_out)                  # resiudal_if_possible=True
    params = dict(w1=w1, b1=b1, w2=w2, b2=b2, w3=w3, b3=b3)
    return params, residual


@functools.partial(jax.jit, static_argnames=("residual", "block_b"))
def node_to_edge_feat(xa, xb, params, residual, block_b=1024):
    B, n_in = xa.shape
    n_mlp_in, n_hidden = params["w1"].shape
    n_out = params["w3"].shape[1]
    assert n_mlp_in == 2 * n_in
    if residual:
        assert n_out == 2 * n_in, "residual requires n_out == 2*n_in"

    # Host-side split of W1 along the contraction dim (shared-weight MLP):
    # W1a multiplies the first concat half, W1b the second.  Weights go to the
    # MXU as bf16; biases stay f32 for the VPU add.
    w1a = params["w1"][:n_in].astype(jnp.bfloat16)
    w1b = params["w1"][n_in:].astype(jnp.bfloat16)
    w2 = params["w2"].astype(jnp.bfloat16)
    w3 = params["w3"].astype(jnp.bfloat16)
    b1 = params["b1"].astype(jnp.float32)
    b2 = params["b2"].astype(jnp.float32)
    b3 = params["b3"].astype(jnp.float32)

    # Batch tile: multiple of 16 (sublane friendly for the bf16 activations),
    # ragged tail handled by Pallas (padded reads, masked writes).
    block_b = max(16, min(block_b, _round_up(B, 16)))
    grid = (pl.cdiv(B, block_b),)

    def const(shape):                               # whole-array, VMEM-resident block
        return pl.BlockSpec(shape, lambda i: (0,) * len(shape))

    kernel = functools.partial(_node_to_edge_kernel, residual=residual)

    # Advisory cost based on the true (unpadded) dims.
    flops = 2 * (2 * B) * (n_mlp_in * n_hidden
                           + n_hidden * n_hidden
                           + n_hidden * n_out)
    param_arrays = (w1a, w1b, b1, w2, b2, w3, b3)
    bytes_accessed = ((xa.size + xb.size) * xa.dtype.itemsize
                      + sum(int(a.size) * a.dtype.itemsize for a in param_arrays)
                      + B * n_out * 4)

    out = pl.pallas_call(
        kernel,
        out_shape=jax.ShapeDtypeStruct((B, n_out), jnp.float32),
        grid_spec=pltpu.PrefetchScalarGridSpec(
            num_scalar_prefetch=0,
            grid=grid,
            in_specs=[
                pl.BlockSpec((block_b, n_in), lambda i: (i, 0)),   # xa tile (f32)
                pl.BlockSpec((block_b, n_in), lambda i: (i, 0)),   # xb tile (f32)
                const((n_in, n_hidden)),                           # w1a
                const((n_in, n_hidden)),                           # w1b
                const((1, n_hidden)),                              # b1
                const((n_hidden, n_hidden)),                       # w2
                const((1, n_hidden)),                              # b2
                const((n_hidden, n_out)),                          # w3
                const((1, n_out)),                                 # b3
            ],
            out_specs=pl.BlockSpec((block_b, n_out), lambda i: (i, 0)),
        ),
        compiler_params=pltpu.CompilerParams(
            dimension_semantics=("parallel",),
            vmem_limit_bytes=64 * 1024 * 1024),
        cost_estimate=pl.CostEstimate(flops=flops, transcendentals=0,
                                      bytes_accessed=int(bytes_accessed)),
    )(xa, xb, w1a, w1b, b1, w2, b2, w3, b3)

    return out


def _reference(xa, xb, params, residual):
    """Pure-JAX f32 reference for a correctness sanity check."""
    def mlp(x):
        h = jnp.maximum(x @ params["w1"] + params["b1"], 0.0)
        h = jnp.maximum(h @ params["w2"] + params["b2"], 0.0)
        y = jnp.maximum(h @ params["w3"] + params["b3"], 0.0)
        return (x + y) * 0.5 if residual else y
    xab = jnp.concatenate([xa, xb], axis=1)
    xba = jnp.concatenate([xb, xa], axis=1)
    return (mlp(xab) + mlp(xba)) * 0.5


if __name__ == "__main__":
    # 2*n_in == n_out -> residual path active.  B=256 with block_b=128 gives a
    # 2-step parallel grid (pipelined DMAs; both TensorCores busy on v7x).
    B, n_in, n_out = 256, 16, 32
    key = jax.random.PRNGKey(0)
    k_xa, k_xb, k_p = jax.random.split(key, 3)

    xa = jax.random.normal(k_xa, (B, n_in), jnp.float32)
    xb = jax.random.normal(k_xb, (B, n_in), jnp.float32)
    params, residual = make_params(k_p, n_in, n_out)

    out = node_to_edge_feat(xa, xb, params, residual, block_b=128)
    out = jax.block_until_ready(out)
    assert out.shape == (B, n_out)

    # Reference: bf16-rounded inputs/weights (what the MXU sees), f32 biases
    # (the kernel keeps biases in f32), f32 math everywhere else.
    rnd = lambda t: t.astype(jnp.bfloat16).astype(jnp.float32)
    ref_params = dict(params)
    for k in ("w1", "w2", "w3"):
        ref_params[k] = rnd(params[k])
    ref = _reference(rnd(xa), rnd(xb), ref_params, residual)
    assert jnp.allclose(out, ref, atol=5e-2, rtol=5e-2), \
        float(jnp.max(jnp.abs(out - ref)))

    print("KERNEL_OK")
</pallas_src>

<mosaic_0001>
module attributes {stable_mosaic.version = 11 : i64} {
  func.func @_node_to_edge_kernel(%arg0: i32, %arg1: memref<128x16xf32, #tpu.memory_space<vmem>>, %arg2: memref<128x16xf32, #tpu.memory_space<vmem>>, %arg3: memref<16x64xbf16, #tpu.memory_space<vmem>>, %arg4: memref<16x64xbf16, #tpu.memory_space<vmem>>, %arg5: memref<1x64xf32, #tpu.memory_space<vmem>>, %arg6: memref<64x64xbf16, #tpu.memory_space<vmem>>, %arg7: memref<1x64xf32, #tpu.memory_space<vmem>>, %arg8: memref<64x32xbf16, #tpu.memory_space<vmem>>, %arg9: memref<1x32xf32, #tpu.memory_space<vmem>>, %arg10: memref<128x32xf32, #tpu.memory_space<vmem>>) attributes {dimension_semantics = [#tpu.dimension_semantics<parallel>], iteration_bounds = array<i64: 2>, scalar_prefetch = 0 : i64, scratch_operands = 0 : i64, tpu.core_type = #tpu.core_type<tc>, window_params = [{transform_indices = @transform_0, window_bounds = array<i64: 128, 16>}, {transform_indices = @transform_1, window_bounds = array<i64: 128, 16>}, {pipeline_mode = #tpu.pipeline_mode<synchronous>, transform_indices = @transform_2, window_bounds = array<i64: 16, 64>}, {pipeline_mode = #tpu.pipeline_mode<synchronous>, transform_indices = @transform_3, window_bounds = array<i64: 16, 64>}, {pipeline_mode = #tpu.pipeline_mode<synchronous>, transform_indices = @transform_4, window_bounds = array<i64: 1, 64>}, {pipeline_mode = #tpu.pipeline_mode<synchronous>, transform_indices = @transform_5, window_bounds = array<i64: 64, 64>}, {pipeline_mode = #tpu.pipeline_mode<synchronous>, transform_indices = @transform_6, window_bounds = array<i64: 1, 64>}, {pipeline_mode = #tpu.pipeline_mode<synchronous>, transform_indices = @transform_7, window_bounds = array<i64: 64, 32>}, {pipeline_mode = #tpu.pipeline_mode<synchronous>, transform_indices = @transform_8, window_bounds = array<i64: 1, 32>}, {transform_indices = @transform_9, window_bounds = array<i64: 128, 32>}]} {
    %c0 = arith.constant 0 : index
    %c0_0 = arith.constant 0 : index
    %0 = vector.load %arg1[%c0, %c0_0] : memref<128x16xf32, #tpu.memory_space<vmem>>, vector<128x16xf32>
    %1 = arith.truncf %0 : vector<128x16xf32> to vector<128x16xbf16>
    %c0_1 = arith.constant 0 : index
    %c0_2 = arith.constant 0 : index
    %2 = vector.load %arg2[%c0_1, %c0_2] : memref<128x16xf32, #tpu.memory_space<vmem>>, vector<128x16xf32>
    %3 = arith.truncf %2 : vector<128x16xf32> to vector<128x16xbf16>
    %4 = tpu.concatenate %1, %3 in 0 : vector<128x16xbf16>, vector<128x16xbf16> -> vector<256x16xbf16>
    %5 = tpu.concatenate %3, %1 in 0 : vector<128x16xbf16>, vector<128x16xbf16> -> vector<256x16xbf16>
    %c0_3 = arith.constant 0 : index
    %c0_4 = arith.constant 0 : index
    %6 = vector.load %arg3[%c0_3, %c0_4] : memref<16x64xbf16, #tpu.memory_space<vmem>>, vector<16x64xbf16>
    %cst = arith.constant dense<0.000000e+00> : vector<256x64xf32>
    %7 = tpu.matmul %4, %6, %cst {dimension_numbers = #tpu.dot_dimension_numbers<[1], [0], [0], [1], [0, 0, 1, 1], [], []>} : vector<256x16xbf16>, vector<16x64xbf16>, vector<256x64xf32> -> vector<256x64xf32>
    %c0_5 = arith.constant 0 : index
    %c0_6 = arith.constant 0 : index
    %8 = vector.load %arg4[%c0_5, %c0_6] : memref<16x64xbf16, #tpu.memory_space<vmem>>, vector<16x64xbf16>
    %cst_7 = arith.constant dense<0.000000e+00> : vector<256x64xf32>
    %9 = tpu.matmul %5, %8, %cst_7 {dimension_numbers = #tpu.dot_dimension_numbers<[1], [0], [0], [1], [0, 0, 1, 1], [], []>} : vector<256x16xbf16>, vector<16x64xbf16>, vector<256x64xf32> -> vector<256x64xf32>
    %10 = arith.addf %7, %9 : vector<256x64xf32>
    %c0_8 = arith.constant 0 : index
    %c0_9 = arith.constant 0 : index
    %11 = vector.load %arg5[%c0_8, %c0_9] : memref<1x64xf32, #tpu.memory_space<vmem>>, vector<1x64xf32>
    %12 = vector.broadcast %11 : vector<1x64xf32> to vector<256x64xf32>
    %13 = arith.addf %10, %12 : vector<256x64xf32>
    %cst_10 = arith.constant 0.000000e+00 : f32
    %14 = vector.broadcast %cst_10 : f32 to vector<256x64xf32>
    %15 = arith.maximumf %13, %14 : vector<256x64xf32>
    %16 = arith.truncf %15 : vector<256x64xf32> to vector<256x64xbf16>
    %c0_11 = arith.constant 0 : index
    %c0_12 = arith.constant 0 : index
    %17 = vector.load %arg6[%c0_11, %c0_12] : memref<64x64xbf16, #tpu.memory_space<vmem>>, vector<64x64xbf16>
    %cst_13 = arith.constant dense<0.000000e+00> : vector<256x64xf32>
    %18 = tpu.matmul %16, %17, %cst_13 {dimension_numbers = #tpu.dot_dimension_numbers<[1], [0], [0], [1], [0, 0, 1, 1], [], []>} : vector<256x64xbf16>, vector<64x64xbf16>, vector<256x64xf32> -> vector<256x64xf32>
    %c0_14 = arith.constant 0 : index
    %c0_15 = arith.constant 0 : index
    %19 = vector.load %arg7[%c0_14, %c0_15] : memref<1x64xf32, #tpu.memory_space<vmem>>, vector<1x64xf32>
    %20 = vector.broadcast %19 : vector<1x64xf32> to vector<256x64xf32>
    %21 = arith.addf %18, %20 : vector<256x64xf32>
    %cst_16 = arith.constant 0.000000e+00 : f32
    %22 = vector.broadcast %cst_16 : f32 to vector<256x64xf32>
    %23 = arith.maximumf %21, %22 : vector<256x64xf32>
    %24 = arith.truncf %23 : vector<256x64xf32> to vector<256x64xbf16>
    %c0_17 = arith.constant 0 : index
    %c0_18 = arith.constant 0 : index
    %25 = vector.load %arg8[%c0_17, %c0_18] : memref<64x32xbf16, #tpu.memory_space<vmem>>, vector<64x32xbf16>
    %cst_19 = arith.constant dense<0.000000e+00> : vector<256x32xf32>
    %26 = tpu.matmul %24, %25, %cst_19 {dimension_numbers = #tpu.dot_dimension_numbers<[1], [0], [0], [1], [0, 0, 1, 1], [], []>} : vector<256x64xbf16>, vector<64x32xbf16>, vector<256x32xf32> -> vector<256x32xf32>
    %c0_20 = arith.constant 0 : index
    %c0_21 = arith.constant 0 : index
    %27 = vector.load %arg9[%c0_20, %c0_21] : memref<1x32xf32, #tpu.memory_space<vmem>>, vector<1x32xf32>
    %28 = vector.broadcast %27 : vector<1x32xf32> to vector<256x32xf32>
    %29 = arith.addf %26, %28 : vector<256x32xf32>
    %cst_22 = arith.constant 0.000000e+00 : f32
    %30 = vector.broadcast %cst_22 : f32 to vector<256x32xf32>
    %31 = arith.maximumf %29, %30 : vector<256x32xf32>
    %32 = tpu.concatenate %4, %5 in 1 : vector<256x16xbf16>, vector<256x16xbf16> -> vector<256x32xbf16>
    %33 = arith.extf %32 : vector<256x32xbf16> to vector<256x32xf32>
    %34 = arith.addf %33, %31 : vector<256x32xf32>
    %cst_23 = arith.constant 5.000000e-01 : f32
    %35 = vector.broadcast %cst_23 : f32 to vector<256x32xf32>
    %36 = arith.mulf %34, %35 : vector<256x32xf32>
    %37 = vector.extract_strided_slice %36 {offsets = [0, 0], sizes = [128, 32], strides = [1, 1]} : vector<256x32xf32> to vector<128x32xf32>
    %38 = vector.extract_strided_slice %36 {offsets = [128, 0], sizes = [128, 32], strides = [1, 1]} : vector<256x32xf32> to vector<128x32xf32>
    %39 = arith.addf %37, %38 : vector<128x32xf32>
    %cst_24 = arith.constant 5.000000e-01 : f32
    %40 = vector.broadcast %cst_24 : f32 to vector<128x32xf32>
    %41 = arith.mulf %39, %40 : vector<128x32xf32>
    %c0_25 = arith.constant 0 : index
    %c0_26 = arith.constant 0 : index
    %42 = vector.load %arg10[%c0_25, %c0_26] : memref<128x32xf32, #tpu.memory_space<vmem>>, vector<128x32xf32>
    tpu.vector_store %arg10[%c0_25, %c0_26], %41 {strides = array<i32>} : memref<128x32xf32, #tpu.memory_space<vmem>>, vector<128x32xf32>,
    return
  }
  func.func @transform_0(%arg0: i32) -> (i32, i32) {
    %c0_i32 = arith.constant 0 : i32
    %c0_i32_0 = arith.constant 0 : i32
    return %arg0, %c0_i32 : i32, i32
  }
  func.func @transform_1(%arg0: i32) -> (i32, i32) {
    %c0_i32 = arith.constant 0 : i32
    %c0_i32_0 = arith.constant 0 : i32
    return %arg0, %c0_i32 : i32, i32
  }
  func.func @transform_2(%arg0: i32) -> (i32, i32) {
    %c0_i32 = arith.constant 0 : i32
    %c0_i32_0 = arith.constant 0 : i32
    %c0_i32_1 = arith.constant 0 : i32
    return %c0_i32, %c0_i32_0 : i32, i32
  }
  func.func @transform_3(%arg0: i32) -> (i32, i32) {
    %c0_i32 = arith.constant 0 : i32
    %c0_i32_0 = arith.constant 0 : i32
    %c0_i32_1 = arith.constant 0 : i32
    return %c0_i32, %c0_i32_0 : i32, i32
  }
  func.func @transform_4(%arg0: i32) -> (i32, i32) {
    %c0_i32 = arith.constant 0 : i32
    %c0_i32_0 = arith.constant 0 : i32
    %c0_i32_1 = arith.constant 0 : i32
    return %c0_i32, %c0_i32_0 : i32, i32
  }
  func.func @transform_5(%arg0: i32) -> (i32, i32) {
    %c0_i32 = arith.constant 0 : i32
    %c0_i32_0 = arith.constant 0 : i32
    %c0_i32_1 = arith.constant 0 : i32
    return %c0_i32, %c0_i32_0 : i32, i32
  }
  func.func @transform_6(%arg0: i32) -> (i32, i32) {
    %c0_i32 = arith.constant 0 : i32
    %c0_i32_0 = arith.constant 0 : i32
    %c0_i32_1 = arith.constant 0 : i32
    return %c0_i32, %c0_i32_0 : i32, i32
  }
  func.func @transform_7(%arg0: i32) -> (i32, i32) {
    %c0_i32 = arith.constant 0 : i32
    %c0_i32_0 = arith.constant 0 : i32
    %c0_i32_1 = arith.constant 0 : i32
    return %c0_i32, %c0_i32_0 : i32, i32
  }
  func.func @transform_8(%arg0: i32) -> (i32, i32) {
    %c0_i32 = arith.constant 0 : i32
    %c0_i32_0 = arith.constant 0 : i32
    %c0_i32_1 = arith.constant 0 : i32
    return %c0_i32, %c0_i32_0 : i32, i32
  }
  func.func @transform_9(%arg0: i32) -> (i32, i32) {
    %c0_i32 = arith.constant 0 : i32
    %c0_i32_0 = arith.constant 0 : i32
    return %arg0, %c0_i32 : i32, i32
  }
}

</mosaic_0001>

<llo_original>
// kernel: node_to_edge_feat.1
$region0: #{node_to_edge_feat.1}
  #allocation0 [shape = 'u32[]', space=smem, size = 0x4, offset = 0x4, fixed_abs, tag = 'smem constant byte address 0x4 - core index']
  #allocation1 [shape = 'u32[144,128]{1,0:T(1,128)}', space=vmem, size = 0x12000, scoped, tag = 'internal scratch']
  %s0 = inlined_call_operand.vmem [shape: f32[256,16], index: 0, kind: input, shape index: {}]
  %s1 = inlined_call_operand.vmem [shape: f32[256,16], index: 1, kind: input, shape index: {}]
  %s2 = inlined_call_operand.vmem [shape: bf16[16,64], index: 2, kind: input, shape index: {}]
  %s3 = inlined_call_operand.vmem [shape: bf16[16,64], index: 3, kind: input, shape index: {}]
  %s4 = inlined_call_operand.vmem [shape: f32[1,64], index: 4, kind: input, shape index: {}]
  %s5 = inlined_call_operand.vmem [shape: bf16[64,64], index: 5, kind: input, shape index: {}]
  %s6 = inlined_call_operand.vmem [shape: f32[1,64], index: 6, kind: input, shape index: {}]
  %s7 = inlined_call_operand.vmem [shape: bf16[64,32], index: 7, kind: input, shape index: {}]
  %s8 = inlined_call_operand.vmem [shape: f32[1,32], index: 8, kind: input, shape index: {}]
  %s9 = inlined_call_operand.vmem [shape: f32[256,32], index: 9, kind: output, shape index: {}]
  %s10 = sld [smem:[#allocation0]]
  $region69: #{node_to_edge_feat.1} parent=0
    _
  %s12 = ssub.s32 1, %s10
  %s13 = scalar_select 0, %s12, %s10
  loop: start=0, step=1, limit=4
  $region2: #{node_to_edge_feat.1} parent=0 // loop_pre_header
    _
  $region3: #{node_to_edge_feat.1} parent=0 // loop_header
    %s15 = sphi 0, %s19
    %p16 = scmp.ge.s32.totalorder %s15, 4
    %s25 = sphi 0, %s27
    %s28 = sphi 0, %s25
    %s29 = sphi 0, %s28
    %s45 = sphi 0, %s29
    %s51 = sphi 0, %s53
    %s54 = sphi 0, %s51
    %s55 = sphi 0, %s54
    %s71 = sphi 0, %s55
    %s75 = sphi 0, %s75
    %s77 = sphi 0, %s75
    %s78 = sphi 0, %s77
    %s92 = sphi 0, %s78
    %s96 = sphi 0, %s96
    %s98 = sphi 0, %s96
    %s99 = sphi 0, %s98
    %s113 = sphi 0, %s99
    %s117 = sphi 0, %s117
    %s119 = sphi 0, %s117
    %s120 = sphi 0, %s119
    %s134 = sphi 0, %s120
    %s138 = sphi 0, %s138
    %s140 = sphi 0, %s138
    %s141 = sphi 0, %s140
    %s155 = sphi 0, %s141
    %s159 = sphi 0, %s159
    %s161 = sphi 0, %s159
    %s162 = sphi 0, %s161
    %s176 = sphi 0, %s162
    %s180 = sphi 0, %s180
    %s182 = sphi 0, %s180
    %s183 = sphi 0, %s182
    %s197 = sphi 0, %s183
    %s201 = sphi 0, %s201
    %s203 = sphi 0, %s201
    %s204 = sphi 0, %s203
    %s218 = sphi 0, %s204
    %s224 = sphi 0, %s226
    %s227 = sphi 0, %s224
    %s228 = sphi 0, %s227
    %s244 = sphi 0, %s228
  $region4: #{node_to_edge_feat.1} parent=0 // loop_header_branch
    %18 = sbr.rel (%p16) target = $region8
  $region5: #{node_to_edge_feat.1} parent=0 // loop_body
    %s20 = ssub.s32 %s15, 1
    %s21 = ssub.s32 %s15, 2
    %s22 = sadd.s32 %s15, 1
    %s23 = ssub.s32 %s15, %s22
    %p24 = scmp.eq.s32.totalorder %s23, 0
    %s26 = sadd.s32 %s25, 1
    %s27 = scalar_select %p24, %s25, %s26
    %p30 = pneg %p24
    %p31 = scmp.eq.s32.totalorder %s15, 1
    %p32 = por %p30, %p31
    %p33 = scmp.ne.s32.totalorder %s25, %s28
    %p34 = scmp.eq.s32.totalorder %s15, 0
    %p35 = por %p33, %p34
    %p36 = scmp.ne.s32.totalorder %s25, %s28
    %p37 = scmp.eq.s32.totalorder %s20, 1
    %p38 = por %p36, %p37
    %p39 = scmp.ne.s32.totalorder %s28, %s29
    %p40 = scmp.eq.s32.totalorder %s20, 0
    %p41 = por %p39, %p40
    %p42 = scmp.ne.s32.totalorder %s28, %s29
    %p43 = scmp.eq.s32.totalorder %s21, 1
    %p44 = por %p42, %p43
    %p46 = scmp.ne.s32.totalorder %s29, %s45
    %p47 = scmp.eq.s32.totalorder %s21, 0
    %p48 = por %p46, %p47
    %s49 = ssub.s32 %s15, %s22
    %p50 = scmp.eq.s32.totalorder %s49, 0
    %s52 = sadd.s32 %s51, 1
    %s53 = scalar_select %p50, %s51, %s52
    %p56 = pneg %p50
    %p57 = scmp.eq.s32.totalorder %s15, 1
    %p58 = por %p56, %p57
    %p59 = scmp.ne.s32.totalorder %s51, %s54
    %p60 = scmp.eq.s32.totalorder %s15, 0
    %p61 = por %p59, %p60
    %p62 = scmp.ne.s32.totalorder %s51, %s54
    %p63 = scmp.eq.s32.totalorder %s20, 1
    %p64 = por %p62, %p63
    %p65 = scmp.ne.s32.totalorder %s54, %s55
    %p66 = scmp.eq.s32.totalorder %s20, 0
    %p67 = por %p65, %p66
    %p68 = scmp.ne.s32.totalorder %s54, %s55
    %p69 = scmp.eq.s32.totalorder %s21, 1
    %p70 = por %p68, %p69
    %p72 = scmp.ne.s32.totalorder %s55, %s71
    %p73 = scmp.eq.s32.totalorder %s21, 0
    %p74 = por %p72, %p73
    %s76 = sadd.s32 %s75, 1
    %p79 = scmp.eq.s32.totalorder %s15, 1
    %p80 = scmp.ne.s32.totalorder %s75, %s77
    %p81 = scmp.eq.s32.totalorder %s15, 0
    %p82 = por %p80, %p81
    %p83 = scmp.ne.s32.totalorder %s75, %s77
    %p84 = scmp.eq.s32.totalorder %s20, 1
    %p85 = por %p83, %p84
    %p86 = scmp.ne.s32.totalorder %s77, %s78
    %p87 = scmp.eq.s32.totalorder %s20, 0
    %p88 = por %p86, %p87
    %p89 = scmp.ne.s32.totalorder %s77, %s78
    %p90 = scmp.eq.s32.totalorder %s21, 1
    %p91 = por %p89, %p90
    %p93 = scmp.ne.s32.totalorder %s78, %s92
    %p94 = scmp.eq.s32.totalorder %s21, 0
    %p95 = por %p93, %p94
    %s97 = sadd.s32 %s96, 1
    %p100 = scmp.eq.s32.totalorder %s15, 1
    %p101 = scmp.ne.s32.totalorder %s96, %s98
    %p102 = scmp.eq.s32.totalorder %s15, 0
    %p103 = por %p101, %p102
    %p104 = scmp.ne.s32.totalorder %s96, %s98
    %p105 = scmp.eq.s32.totalorder %s20, 1
    %p106 = por %p104, %p105
    %p107 = scmp.ne.s32.totalorder %s98, %s99
    %p108 = scmp.eq.s32.totalorder %s20, 0
    %p109 = por %p107, %p108
    %p110 = scmp.ne.s32.totalorder %s98, %s99
    %p111 = scmp.eq.s32.totalorder %s21, 1
    %p112 = por %p110, %p111
    %p114 = scmp.ne.s32.totalorder %s99, %s113
    %p115 = scmp.eq.s32.totalorder %s21, 0
    %p116 = por %p114, %p115
    %s118 = sadd.s32 %s117, 1
    %p121 = scmp.eq.s32.totalorder %s15, 1
    %p122 = scmp.ne.s32.totalorder %s117, %s119
    %p123 = scmp.eq.s32.totalorder %s15, 0
    %p124 = por %p122, %p123
    %p125 = scmp.ne.s32.totalorder %s117, %s119
    %p126 = scmp.eq.s32.totalorder %s20, 1
    %p127 = por %p125, %p126
    %p128 = scmp.ne.s32.totalorder %s119, %s120
    %p129 = scmp.eq.s32.totalorder %s20, 0
    %p130 = por %p128, %p129
    %p131 = scmp.ne.s32.totalorder %s119, %s120
    %p132 = scmp.eq.s32.totalorder %s21, 1
    %p133 = por %p131, %p132
    %p135 = scmp.ne.s32.totalorder %s120, %s134
    %p136 = scmp.eq.s32.totalorder %s21, 0
    %p137 = por %p135, %p136
    %s139 = sadd.s32 %s138, 1
    %p142 = scmp.eq.s32.totalorder %s15, 1
    %p143 = scmp.ne.s32.totalorder %s138, %s140
    %p144 = scmp.eq.s32.totalorder %s15, 0
    %p145 = por %p143, %p144
    %p146 = scmp.ne.s32.totalorder %s138, %s140
    %p147 = scmp.eq.s32.totalorder %s20, 1
    %p148 = por %p146, %p147
    %p149 = scmp.ne.s32.totalorder %s140, %s141
    %p150 = scmp.eq.s32.totalorder %s20, 0
    %p151 = por %p149, %p150
    %p152 = scmp.ne.s32.totalorder %s140, %s141
    %p153 = scmp.eq.s32.totalorder %s21, 1
    %p154 = por %p152, %p153
    %p156 = scmp.ne.s32.totalorder %s141, %s155
    %p157 = scmp.eq.s32.totalorder %s21, 0
    %p158 = por %p156, %p157
    %s160 = sadd.s32 %s159, 1
    %p163 = scmp.eq.s32.totalorder %s15, 1
    %p164 = scmp.ne.s32.totalorder %s159, %s161
    %p165 = scmp.eq.s32.totalorder %s15, 0
    %p166 = por %p164, %p165
    %p167 = scmp.ne.s32.totalorder %s159, %s161
    %p168 = scmp.eq.s32.totalorder %s20, 1
    %p169 = por %p167, %p168
    %p170 = scmp.ne.s32.totalorder %s161, %s162
    %p171 = scmp.eq.s32.totalorder %s20, 0
    %p172 = por %p170, %p171
    %p173 = scmp.ne.s32.totalorder %s161, %s162
    %p174 = scmp.eq.s32.totalorder %s21, 1
    %p175 = por %p173, %p174
    %p177 = scmp.ne.s32.totalorder %s162, %s176
    %p178 = scmp.eq.s32.totalorder %s21, 0
    %p179 = por %p177, %p178
    %s181 = sadd.s32 %s180, 1
    %p184 = scmp.eq.s32.totalorder %s15, 1
    %p185 = scmp.ne.s32.totalorder %s180, %s182
    %p186 = scmp.eq.s32.totalorder %s15, 0
    %p187 = por %p185, %p186
    %p188 = scmp.ne.s32.totalorder %s180, %s182
    %p189 = scmp.eq.s32.totalorder %s20, 1
    %p190 = por %p188, %p189
    %p191 = scmp.ne.s32.totalorder %s182, %s183
    %p192 = scmp.eq.s32.totalorder %s20, 0
    %p193 = por %p191, %p192
    %p194 = scmp.ne.s32.totalorder %s182, %s183
    %p195 = scmp.eq.s32.totalorder %s21, 1
    %p196 = por %p194, %p195
    %p198 = scmp.ne.s32.totalorder %s183, %s197
    %p199 = scmp.eq.s32.totalorder %s21, 0
    %p200 = por %p198, %p199
    %s202 = sadd.s32 %s201, 1
    %p205 = scmp.eq.s32.totalorder %s15, 1
    %p206 = scmp.ne.s32.totalorder %s201, %s203
    %p207 = scmp.eq.s32.totalorder %s15, 0
    %p208 = por %p206, %p207
    %p209 = scmp.ne.s32.totalorder %s201, %s203
    %p210 = scmp.eq.s32.totalorder %s20, 1
    %p211 = por %p209, %p210
    %p212 = scmp.ne.s32.totalorder %s203, %s204
    %p213 = scmp.eq.s32.totalorder %s20, 0
    %p214 = por %p212, %p213
    %p215 = scmp.ne.s32.totalorder %s203, %s204
    %p216 = scmp.eq.s32.totalorder %s21, 1
    %p217 = por %p215, %p216
    %p219 = scmp.ne.s32.totalorder %s204, %s218
    %p220 = scmp.eq.s32.totalorder %s21, 0
    %p221 = por %p219, %p220
    %s222 = ssub.s32 %s15, %s22
    %p223 = scmp.eq.s32.totalorder %s222, 0
    %s225 = sadd.s32 %s224, 1
    %s226 = scalar_select %p223, %s224, %s225
    %p229 = pneg %p223
    %p230 = scmp.eq.s32.totalorder %s15, 1
    %p231 = por %p229, %p230
    %p232 = scmp.ne.s32.totalorder %s224, %s227
    %p233 = scmp.eq.s32.totalorder %s15, 0
    %p234 = por %p232, %p233
    %p235 = scmp.ne.s32.totalorder %s224, %s227
    %p236 = scmp.eq.s32.totalorder %s20, 1
    %p237 = por %p235, %p236
    %p238 = scmp.ne.s32.totalorder %s227, %s228
    %p239 = scmp.eq.s32.totalorder %s20, 0
    %p240 = por %p238, %p239
    %p241 = scmp.ne.s32.totalorder %s227, %s228
    %p242 = scmp.eq.s32.totalorder %s21, 1
    %p243 = por %p241, %p242
    %p245 = scmp.ne.s32.totalorder %s228, %s244
    %p246 = scmp.eq.s32.totalorder %s21, 0
    %p247 = por %p245, %p246
    %p248 = scmp.le.s32.totalorder 1, %s15
    %p249 = scmp.lt.s32.totalorder %s15, 3
    %p250 = pnand %p248, %p249
    %p251 = pneg %p250
    // Predicated region
    $region9: #{node_to_edge_feat.1} parent=5 // pred_check
      _
    $region10: #{node_to_edge_feat.1} parent=5 // pred_check_branch
      %253 = sbr.rel (%p250) target = $region12
    $region11: #{node_to_edge_feat.1} parent=5 // pred_region
      %s254 = ssub.s32 %s15, 1
      // Predicated region
      $region13: #{node_to_edge_feat.1} parent=11 // pred_check
        %p255 = pneg %p88
      $region14: #{node_to_edge_feat.1} parent=11 // pred_check_branch
        %257 = sbr.rel (%p255) target = $region16
      $region15: #{node_to_edge_feat.1} parent=11 // pred_region
        _
      $region16: #{node_to_edge_feat.1} parent=11 // pred_fallthru
        _
      // Predicated region
      $region17: #{node_to_edge_feat.1} parent=11 // pred_check
        %p258 = pneg %p109
      $region18: #{node_to_edge_feat.1} parent=11 // pred_check_branch
        %260 = sbr.rel (%p258) target = $region20
      $region19: #{node_to_edge_feat.1} parent=11 // pred_region
        _
      $region20: #{node_to_edge_feat.1} parent=11 // pred_fallthru
        _
      // Predicated region
      $region21: #{node_to_edge_feat.1} parent=11 // pred_check
        %p261 = pneg %p130
      $region22: #{node_to_edge_feat.1} parent=11 // pred_check_branch
        %263 = sbr.rel (%p261) target = $region24
      $region23: #{node_to_edge_feat.1} parent=11 // pred_region
        _
      $region24: #{node_to_edge_feat.1} parent=11 // pred_fallthru
        _
      // Predicated region
      $region25: #{node_to_edge_feat.1} parent=11 // pred_check
        %p264 = pneg %p151
      $region26: #{node_to_edge_feat.1} parent=11 // pred_check_branch
        %266 = sbr.rel (%p264) target = $region28
      $region27: #{node_to_edge_feat.1} parent=11 // pred_region
        _
      $region28: #{node_to_edge_feat.1} parent=11 // pred_fallthru
        _
      // Predicated region
      $region29: #{node_to_edge_feat.1} parent=11 // pred_check
        %p267 = pneg %p172
      $region30: #{node_to_edge_feat.1} parent=11 // pred_check_branch
        %269 = sbr.rel (%p267) target = $region32
      $region31: #{node_to_edge_feat.1} parent=11 // pred_region
        _
      $region32: #{node_to_edge_feat.1} parent=11 // pred_fallthru
        _
      // Predicated region
      $region33: #{node_to_edge_feat.1} parent=11 // pred_check
        %p270 = pneg %p193
      $region34: #{node_to_edge_feat.1} parent=11 // pred_check_branch
        %272 = sbr.rel (%p270) target = $region36
      $region35: #{node_to_edge_feat.1} parent=11 // pred_region
        _
      $region36: #{node_to_edge_feat.1} parent=11 // pred_fallthru
        _
      // Predicated region
      $region37: #{node_to_edge_feat.1} parent=11 // pred_check
        %p273 = pneg %p214
      $region38: #{node_to_edge_feat.1} parent=11 // pred_check_branch
        %275 = sbr.rel (%p273) target = $region40
      $region39: #{node_to_edge_feat.1} parent=11 // pred_region
        _
      $region40: #{node_to_edge_feat.1} parent=11 // pred_fallthru
        _
    $region12: #{node_to_edge_feat.1} parent=5 // pred_fallthru
      _
    %p276 = scmp.lt.s32.totalorder %s15, 2
    // Predicated region
    $region41: #{node_to_edge_feat.1} parent=5 // pred_check
      %p277 = pneg %p276
    $region42: #{node_to_edge_feat.1} parent=5 // pred_check_branch
      %279 = sbr.rel (%p277) target = $region44
    $region43: #{node_to_edge_feat.1} parent=5 // pred_region
      // Predicated region
      $region45: #{node_to_edge_feat.1} parent=43 // pred_check
        %p280 = pneg %p35
      $region46: #{node_to_edge_feat.1} parent=43 // pred_check_branch
        %282 = sbr.rel (%p280) target = $region48
      $region47: #{node_to_edge_feat.1} parent=43 // pred_region
        %s283 = smul.u32 16, %s15
        %p284 = scmp.lt.s32.totalorder %s283, 31
        %s285 = scalar_select %p284, %s283, 31
        %s286 = smul.addr %s285, 8
        %s287 = scalar_lea.vmem %s0, %s286
        %s288 = smul.u32 16, %s15
      $region48: #{node_to_edge_feat.1} parent=43 // pred_fallthru
        _
      // Predicated region
      $region49: #{node_to_edge_feat.1} parent=43 // pred_check
        %p289 = pneg %p61
      $region50: #{node_to_edge_feat.1} parent=43 // pred_check_branch
        %291 = sbr.rel (%p289) target = $region52
      $region51: #{node_to_edge_feat.1} parent=43 // pred_region
        %s292 = smul.u32 16, %s15
        %p293 = scmp.lt.s32.totalorder %s292, 31
        %s294 = scalar_select %p293, %s292, 31
        %s295 = smul.addr %s294, 8
        %s296 = scalar_lea.vmem %s1, %s295
        %s297 = smul.u32 16, %s15
      $region52: #{node_to_edge_feat.1} parent=43 // pred_fallthru
        _
    $region44: #{node_to_edge_feat.1} parent=5 // pred_fallthru
      _
    %p298 = scmp.le.s32.totalorder 1, %s15
    %p299 = scmp.lt.s32.totalorder %s15, 3
    %p300 = pnand %p298, %p299
    %p301 = pneg %p300
    // Predicated region
    $region53: #{node_to_edge_feat.1} parent=5 // pred_check
      _
    $region54: #{node_to_edge_feat.1} parent=5 // pred_check_branch
      %303 = sbr.rel (%p300) target = $region56
    $region55: #{node_to_edge_feat.1} parent=5 // pred_region
      %s304 = ssub.s32 %s15, 1
      %s305 = smul.u32 16, %s20
      %p306 = scmp.lt.s32.totalorder %s305, 31
      %s307 = scalar_select %p306, %s305, 31
      %s308 = smul.addr %s307, 8
      %s309 = scalar_lea.vmem %s0, %s308
      %p310 = pneg %p41
      %p311 = pneg %p38
      %s312 = smul.u32 16, %s20
      %p313 = scmp.lt.s32.totalorder %s312, 31
      %s314 = scalar_select %p313, %s312, 31
      %s315 = smul.addr %s314, 8
      %s316 = scalar_lea.vmem %s1, %s315
      %p317 = pneg %p67
      %p318 = pneg %p64
      %p319 = pneg %p88
      %p320 = pneg %p85
      %p321 = pneg %p109
      %p322 = pneg %p106
      %p323 = pneg %p130
      %p324 = pneg %p127
      %p325 = pneg %p151
      %p326 = pneg %p148
      %p327 = pneg %p172
      %p328 = pneg %p169
      %p329 = pneg %p193
      %p330 = pneg %p190
      %p331 = pneg %p214
      %p332 = pneg %p211
      %p333 = pneg %p240
      %p334 = pneg %p237
      %s335 = smul.u32 16, %s20
      %p336 = scmp.lt.s32.totalorder %s335, 31
      %s337 = scalar_select %p336, %s335, 31
      %s338 = smul.addr %s337, 8
      %s339 = scalar_lea.vmem %s9, %s338
      %s340 = smul.u32 16, %s20
      %p341 = scmp.lt.s32.totalorder %s340, 31
      %s342 = scalar_select %p341, %s340, 31
      %s343 = smul.addr %s342, 8
      %s344 = scalar_lea.vmem %s0, %s343
      %s345 = smul.u32 16, %s20
      %s346 = smul.u32 16, %s20
      %p347 = scmp.lt.s32.totalorder %s346, 31
      %s348 = scalar_select %p347, %s346, 31
      %s349 = smul.addr %s348, 8
      %s350 = scalar_lea.vmem %s1, %s349
      %s351 = smul.u32 16, %s20
      %s352 = smul.u32 16, %s20
      %p353 = scmp.lt.s32.totalorder %s352, 31
      %s354 = scalar_select %p353, %s352, 31
      %s355 = smul.addr %s354, 8
      %s356 = scalar_lea.vmem %s9, %s355
      %s357 = smul.u32 16, %s20
      %v359 = vld [vmem:[%s344] sm:$0xff]
      %v360 = vld [vmem:[%s344 + $0x8] sm:$0xff]
      %v361 = vld [vmem:[%s344 + $0x10] sm:$0xff]
      %v362 = vld [vmem:[%s344 + $0x18] sm:$0xff]
      %v363 = vld [vmem:[%s344 + $0x20] sm:$0xff]
      %v364 = vld [vmem:[%s344 + $0x28] sm:$0xff]
      %v365 = vld [vmem:[%s344 + $0x30] sm:$0xff]
      %v366 = vld [vmem:[%s344 + $0x38] sm:$0xff]
      %v367 = vld [vmem:[%s344 + $0x40] sm:$0xff]
      %v368 = vld [vmem:[%s344 + $0x48] sm:$0xff]
      %v369 = vld [vmem:[%s344 + $0x50] sm:$0xff]
      %v370 = vld [vmem:[%s344 + $0x58] sm:$0xff]
      %v371 = vld [vmem:[%s344 + $0x60] sm:$0xff]
      %v372 = vld [vmem:[%s344 + $0x68] sm:$0xff]
      %v373 = vld [vmem:[%s344 + $0x70] sm:$0xff]
      %v374 = vld [vmem:[%s344 + $0x78] sm:$0xff]
      %v375 = vpack.c.bf16 %v360, %v359
      %v376 = vpack.c.bf16 %v362, %v361
      %v377 = vpack.c.bf16 %v364, %v363
      %v378 = vpack.c.bf16 %v366, %v365
      %v379 = vpack.c.bf16 %v368, %v367
      %v380 = vpack.c.bf16 %v370, %v369
      %v381 = vpack.c.bf16 %v372, %v371
      %v382 = vpack.c.bf16 %v374, %v373
      %v383 = vld [vmem:[%s350] sm:$0xff]
      %v384 = vld [vmem:[%s350 + $0x8] sm:$0xff]
      %v385 = vld [vmem:[%s350 + $0x10] sm:$0xff]
      %v386 = vld [vmem:[%s350 + $0x18] sm:$0xff]
      %v387 = vld [vmem:[%s350 + $0x20] sm:$0xff]
      %v388 = vld [vmem:[%s350 + $0x28] sm:$0xff]
      %v389 = vld [vmem:[%s350 + $0x30] sm:$0xff]
      %v390 = vld [vmem:[%s350 + $0x38] sm:$0xff]
      %v391 = vld [vmem:[%s350 + $0x40] sm:$0xff]
      %v392 = vld [vmem:[%s350 + $0x48] sm:$0xff]
      %v393 = vld [vmem:[%s350 + $0x50] sm:$0xff]
      %v394 = vld [vmem:[%s350 + $0x58] sm:$0xff]
      %v395 = vld [vmem:[%s350 + $0x60] sm:$0xff]
      %v396 = vld [vmem:[%s350 + $0x68] sm:$0xff]
      %v397 = vld [vmem:[%s350 + $0x70] sm:$0xff]
      %v398 = vld [vmem:[%s350 + $0x78] sm:$0xff]
      %v399 = vpack.c.bf16 %v384, %v383
      %v400 = vpack.c.bf16 %v386, %v385
      %v401 = vpack.c.bf16 %v388, %v387
      %v402 = vpack.c.bf16 %v390, %v389
      %v403 = vpack.c.bf16 %v392, %v391
      %v404 = vpack.c.bf16 %v394, %v393
      %v405 = vpack.c.bf16 %v396, %v395
      %v406 = vpack.c.bf16 %v398, %v397
      %v407 = vld [vmem:[%s2] sm:$0xf]
      %v408 = vld [vmem:[%s2 + $0x4] sm:$0xf]
      %v409 = vld [vmem:[%s3] sm:$0xf]
      %v410 = vld [vmem:[%s3 + $0x4] sm:$0xf]
      %v413 = vunpack.c.l.b16 %v409
      %v414 = vunpack.c.l.b16 %v410
      %v415 = vpack.c.b16 %v414, %v413
      %vm417 = vcmask 130048
      %v419 = vsel %vm417, %v399, 0
      %v422 = vsel %vm417, %v400, 0
      %v425 = vsel %vm417, %v401, 0
      %v428 = vsel %vm417, %v402, 0
      %v431 = vsel %vm417, %v403, 0
      %v434 = vsel %vm417, %v404, 0
      %v437 = vsel %vm417, %v405, 0
      %v440 = vsel %vm417, %v406, 0
      %v443 = vsel %vm417, %v375, 0
      %v446 = vsel %vm417, %v376, 0
      %v449 = vsel %vm417, %v377, 0
      %v452 = vsel %vm417, %v378, 0
      %v455 = vsel %vm417, %v379, 0
      %v458 = vsel %vm417, %v380, 0
      %v461 = vsel %vm417, %v381, 0
      %v464 = vsel %vm417, %v382, 0
      %466 = vmatprep.subr.bf16.mxu0 0
      %467 = vmatpush1.bf16.msra.mxu0 0
      %468 = vmatprep.subr.bf16.mxu0 0
      %469 = vmatpush1.bf16.msra.mxu0 0
      %470 = vmatprep.subr.bf16.mxu0 0
      %471 = vmatpush1.bf16.msra.mxu0 0
      %472 = vmatprep.subr.bf16.mxu0 0
      %473 = vmatpush1.bf16.msra.mxu0 0
      %474 = vmatprep.subr.bf16.mxu0 0
      %475 = vmatpush1.bf16.msra.mxu0 0
      %476 = vmatprep.subr.bf16.mxu0 0
      %477 = vmatpush1.bf16.msra.mxu0 0
      %478 = vmatprep.subr.bf16.mxu0 0
      %479 = vmatpush1.bf16.msra.mxu0 0
      %480 = vmatprep.subr.bf16.mxu0 0
      %481 = vmatpush1.bf16.msra.mxu0 %v415
      %482 = vmatprep.subr.bf16.mxu0 0
      %483 = vmatpush2.bf16.msra.mxu0 0
      %484 = vmatprep.subr.bf16.mxu0 0
      %485 = vmatpush2.bf16.msra.mxu0 0
      %486 = vmatprep.subr.bf16.mxu0 0
      %487 = vmatpush2.bf16.msra.mxu0 0
      %488 = vmatprep.subr.bf16.mxu0 0
      %489 = vmatpush2.bf16.msra.mxu0 0
      %490 = vmatprep.subr.bf16.mxu0 0
      %491 = vmatpush2.bf16.msra.mxu0 0
      %492 = vmatprep.subr.bf16.mxu0 0
      %493 = vmatpush2.bf16.msra.mxu0 0
      %494 = vmatprep.subr.bf16.mxu0 0
      %495 = vmatpush2.bf16.msra.mxu0 0
      %496 = vmatprep.subr.bf16.mxu0 0
      %497 = vmatpush2.bf16.msra.mxu0 0
      %498 = vmatprep.mubr.bf16.mxu0 0
      %499 = vmatmul.mubr.bf16.gmra.mxu0 %v419
      %v500 = vpop.f32.mrf.mxu0
      %v501 = vadd.f32 0.0, %v500
      %v502 = vpop.f32.mrf.mxu0
      %v503 = vpop.f32.mrf.mxu0
      %v504 = vadd.f32 0.0, %v503
      %v505 = vpop.f32.mrf.mxu0
      %506 = vmatprep.mubr.bf16.mxu0 0
      %507 = vmatmul.mubr.bf16.gmra.mxu0 %v422
      %v508 = vpop.f32.mrf.mxu0
      %v509 = vadd.f32 0.0, %v508
      %v510 = vpop.f32.mrf.mxu0
      %v511 = vpop.f32.mrf.mxu0
      %v512 = vadd.f32 0.0, %v511
      %v513 = vpop.f32.mrf.mxu0
      %514 = vmatprep.mubr.bf16.mxu0 0
      %515 = vmatmul.mubr.bf16.gmra.mxu0 %v425
      %v516 = vpop.f32.mrf.mxu0
      %v517 = vadd.f32 0.0, %v516
      %v518 = vpop.f32.mrf.mxu0
      %v519 = vpop.f32.mrf.mxu0
      %v520 = vadd.f32 0.0, %v519
      %v521 = vpop.f32.mrf.mxu0
      %522 = vmatprep.mubr.bf16.mxu0 0
      %523 = vmatmul.mubr.bf16.gmra.mxu0 %v428
      %v524 = vpop.f32.mrf.mxu0
      %v525 = vadd.f32 0.0, %v524
      %v526 = vpop.f32.mrf.mxu0
      %v527 = vpop.f32.mrf.mxu0
      %v528 = vadd.f32 0.0, %v527
      %v529 = vpop.f32.mrf.mxu0
      %530 = vmatprep.mubr.bf16.mxu0 0
      %531 = vmatmul.mubr.bf16.gmra.mxu0 %v431
      %v532 = vpop.f32.mrf.mxu0
      %v533 = vadd.f32 0.0, %v532
      %v534 = vpop.f32.mrf.mxu0
      %v535 = vpop.f32.mrf.mxu0
      %v536 = vadd.f32 0.0, %v535
      %v537 = vpop.f32.mrf.mxu0
      %538 = vmatprep.mubr.bf16.mxu0 0
      %539 = vmatmul.mubr.bf16.gmra.mxu0 %v434
      %v540 = vpop.f32.mrf.mxu0
      %v541 = vadd.f32 0.0, %v540
      %v542 = vpop.f32.mrf.mxu0
      %v543 = vpop.f32.mrf.mxu0
      %v544 = vadd.f32 0.0, %v543
      %v545 = vpop.f32.mrf.mxu0
      %546 = vmatprep.mubr.bf16.mxu0 0
      %547 = vmatmul.mubr.bf16.gmra.mxu0 %v437
      %v548 = vpop.f32.mrf.mxu0
      %v549 = vadd.f32 0.0, %v548
      %v550 = vpop.f32.mrf.mxu0
      %v551 = vpop.f32.mrf.mxu0
      %v552 = vadd.f32 0.0, %v551
      %v553 = vpop.f32.mrf.mxu0
      %554 = vmatprep.mubr.bf16.mxu0 0
      %555 = vmatmul.mubr.bf16.gmra.mxu0 %v440
      %v556 = vpop.f32.mrf.mxu0
      %v557 = vadd.f32 0.0, %v556
      %v558 = vpop.f32.mrf.mxu0
      %v559 = vpop.f32.mrf.mxu0
      %v560 = vadd.f32 0.0, %v559
      %v561 = vpop.f32.mrf.mxu0
      %562 = vmatprep.mubr.bf16.mxu0 0
      %563 = vmatmul.mubr.bf16.gmra.mxu0 %v443
      %v564 = vpop.f32.mrf.mxu0
      %v565 = vadd.f32 0.0, %v564
      %v566 = vpop.f32.mrf.mxu0
      %v567 = vpop.f32.mrf.mxu0
      %v568 = vadd.f32 0.0, %v567
      %v569 = vpop.f32.mrf.mxu0
      %570 = vmatprep.mubr.bf16.mxu0 0
      %571 = vmatmul.mubr.bf16.gmra.mxu0 %v446
      %v572 = vpop.f32.mrf.mxu0
      %v573 = vadd.f32 0.0, %v572
      %v574 = vpop.f32.mrf.mxu0
      %v575 = vpop.f32.mrf.mxu0
      %v576 = vadd.f32 0.0, %v575
      %v577 = vpop.f32.mrf.mxu0
      %578 = vmatprep.mubr.bf16.mxu0 0
      %579 = vmatmul.mubr.bf16.gmra.mxu0 %v449
      %v580 = vpop.f32.mrf.mxu0
      %v581 = vadd.f32 0.0, %v580
      %v582 = vpop.f32.mrf.mxu0
      %v583 = vpop.f32.mrf.mxu0
      %v584 = vadd.f32 0.0, %v583
      %v585 = vpop.f32.mrf.mxu0
      %586 = vmatprep.mubr.bf16.mxu0 0
      %587 = vmatmul.mubr.bf16.gmra.mxu0 %v452
      %v588 = vpop.f32.mrf.mxu0
      %v589 = vadd.f32 0.0, %v588
      %v590 = vpop.f32.mrf.mxu0
      %v591 = vpop.f32.mrf.mxu0
      %v592 = vadd.f32 0.0, %v591
      %v593 = vpop.f32.mrf.mxu0
      %594 = vmatprep.mubr.bf16.mxu0 0
      %595 = vmatmul.mubr.bf16.gmra.mxu0 %v455
      %v596 = vpop.f32.mrf.mxu0
      %v597 = vadd.f32 0.0, %v596
      %v598 = vpop.f32.mrf.mxu0
      %v599 = vpop.f32.mrf.mxu0
      %v600 = vadd.f32 0.0, %v599
      %v601 = vpop.f32.mrf.mxu0
      %602 = vmatprep.mubr.bf16.mxu0 0
      %603 = vmatmul.mubr.bf16.gmra.mxu0 %v458
      %v604 = vpop.f32.mrf.mxu0
      %v605 = vadd.f32 0.0, %v604
      %v606 = vpop.f32.mrf.mxu0
      %v607 = vpop.f32.mrf.mxu0
      %v608 = vadd.f32 0.0, %v607
      %v609 = vpop.f32.mrf.mxu0
      %610 = vmatprep.mubr.bf16.mxu0 0
      %611 = vmatmul.mubr.bf16.gmra.mxu0 %v461
      %v612 = vpop.f32.mrf.mxu0
      %v613 = vadd.f32 0.0, %v612
      %v614 = vpop.f32.mrf.mxu0
      %v615 = vpop.f32.mrf.mxu0
      %v616 = vadd.f32 0.0, %v615
      %v617 = vpop.f32.mrf.mxu0
      %618 = vmatprep.mubr.bf16.mxu0 0
      %619 = vmatmul.mubr.bf16.gmra.mxu0 %v464
      %v620 = vpop.f32.mrf.mxu0
      %v621 = vadd.f32 0.0, %v620
      %v622 = vpop.f32.mrf.mxu0
      %v623 = vpop.f32.mrf.mxu0
      %v624 = vadd.f32 0.0, %v623
      %v625 = vpop.f32.mrf.mxu0
      %626 = vdwg.mxu0
      %v629 = vunpack.c.l.b16 %v407
      %v630 = vunpack.c.l.b16 %v408
      %v631 = vpack.c.b16 %v630, %v629
      %633 = vmatprep.subr.bf16.mxu0 0
      %634 = vmatpush1.bf16.msra.mxu0 0
      %635 = vmatprep.subr.bf16.mxu0 0
      %636 = vmatpush1.bf16.msra.mxu0 0
      %637 = vmatprep.subr.bf16.mxu0 0
      %638 = vmatpush1.bf16.msra.mxu0 0
      %639 = vmatprep.subr.bf16.mxu0 0
      %640 = vmatpush1.bf16.msra.mxu0 0
      %641 = vmatprep.subr.bf16.mxu0 0
      %642 = vmatpush1.bf16.msra.mxu0 0
      %643 = vmatprep.subr.bf16.mxu0 0
      %644 = vmatpush1.bf16.msra.mxu0 0
      %645 = vmatprep.subr.bf16.mxu0 0
      %646 = vmatpush1.bf16.msra.mxu0 0
      %647 = vmatprep.subr.bf16.mxu0 0
      %648 = vmatpush1.bf16.msra.mxu0 %v631
      %649 = vmatprep.subr.bf16.mxu0 0
      %650 = vmatpush2.bf16.msra.mxu0 0
      %651 = vmatprep.subr.bf16.mxu0 0
      %652 = vmatpush2.bf16.msra.mxu0 0
      %653 = vmatprep.subr.bf16.mxu0 0
      %654 = vmatpush2.bf16.msra.mxu0 0
      %655 = vmatprep.subr.bf16.mxu0 0
      %656 = vmatpush2.bf16.msra.mxu0 0
      %657 = vmatprep.subr.bf16.mxu0 0
      %658 = vmatpush2.bf16.msra.mxu0 0
      %659 = vmatprep.subr.bf16.mxu0 0
      %660 = vmatpush2.bf16.msra.mxu0 0
      %661 = vmatprep.subr.bf16.mxu0 0
      %662 = vmatpush2.bf16.msra.mxu0 0
      %663 = vmatprep.subr.bf16.mxu0 0
      %664 = vmatpush2.bf16.msra.mxu0 0
      %665 = vmatprep.mubr.bf16.mxu0 0
      %666 = vmatmul.mubr.bf16.gmra.mxu0 %v443
      %v667 = vpop.f32.mrf.mxu0
      %v668 = vadd.f32 %v501, %v667
      %v669 = vpop.f32.mrf.mxu0
      %v670 = vpop.f32.mrf.mxu0
      %v671 = vadd.f32 %v504, %v670
      %v672 = vpop.f32.mrf.mxu0
      %673 = vmatprep.mubr.bf16.mxu0 0
      %674 = vmatmul.mubr.bf16.gmra.mxu0 %v446
      %v675 = vpop.f32.mrf.mxu0
      %v676 = vadd.f32 %v509, %v675
      %v677 = vpop.f32.mrf.mxu0
      %v678 = vpop.f32.mrf.mxu0
      %v679 = vadd.f32 %v512, %v678
      %v680 = vpop.f32.mrf.mxu0
      %681 = vmatprep.mubr.bf16.mxu0 0
      %682 = vmatmul.mubr.bf16.gmra.mxu0 %v449
      %v683 = vpop.f32.mrf.mxu0
      %v684 = vadd.f32 %v517, %v683
      %v685 = vpop.f32.mrf.mxu0
      %v686 = vpop.f32.mrf.mxu0
      %v687 = vadd.f32 %v520, %v686
      %v688 = vpop.f32.mrf.mxu0
      %689 = vmatprep.mubr.bf16.mxu0 0
      %690 = vmatmul.mubr.bf16.gmra.mxu0 %v452
      %v691 = vpop.f32.mrf.mxu0
      %v692 = vadd.f32 %v525, %v691
      %v693 = vpop.f32.mrf.mxu0
      %v694 = vpop.f32.mrf.mxu0
      %v695 = vadd.f32 %v528, %v694
      %v696 = vpop.f32.mrf.mxu0
      %697 = vmatprep.mubr.bf16.mxu0 0
      %698 = vmatmul.mubr.bf16.gmra.mxu0 %v455
      %v699 = vpop.f32.mrf.mxu0
      %v700 = vadd.f32 %v533, %v699
      %v701 = vpop.f32.mrf.mxu0
      %v702 = vpop.f32.mrf.mxu0
      %v703 = vadd.f32 %v536, %v702
      %v704 = vpop.f32.mrf.mxu0
      %705 = vmatprep.mubr.bf16.mxu0 0
      %706 = vmatmul.mubr.bf16.gmra.mxu0 %v458
      %v707 = vpop.f32.mrf.mxu0
      %v708 = vadd.f32 %v541, %v707
      %v709 = vpop.f32.mrf.mxu0
      %v710 = vpop.f32.mrf.mxu0
      %v711 = vadd.f32 %v544, %v710
      %v712 = vpop.f32.mrf.mxu0
      %713 = vmatprep.mubr.bf16.mxu0 0
      %714 = vmatmul.mubr.bf16.gmra.mxu0 %v461
      %v715 = vpop.f32.mrf.mxu0
      %v716 = vadd.f32 %v549, %v715
      %v717 = vpop.f32.mrf.mxu0
      %v718 = vpop.f32.mrf.mxu0
      %v719 = vadd.f32 %v552, %v718
      %v720 = vpop.f32.mrf.mxu0
      %721 = vmatprep.mubr.bf16.mxu0 0
      %722 = vmatmul.mubr.bf16.gmra.mxu0 %v464
      %v723 = vpop.f32.mrf.mxu0
      %v724 = vadd.f32 %v557, %v723
      %v725 = vpop.f32.mrf.mxu0
      %v726 = vpop.f32.mrf.mxu0
      %v727 = vadd.f32 %v560, %v726
      %v728 = vpop.f32.mrf.mxu0
      %729 = vmatprep.mubr.bf16.mxu0 0
      %730 = vmatmul.mubr.bf16.gmra.mxu0 %v419
      %v731 = vpop.f32.mrf.mxu0
      %v732 = vadd.f32 %v565, %v731
      %v733 = vpop.f32.mrf.mxu0
      %v734 = vpop.f32.mrf.mxu0
      %v735 = vadd.f32 %v568, %v734
      %v736 = vpop.f32.mrf.mxu0
      %737 = vmatprep.mubr.bf16.mxu0 0
      %738 = vmatmul.mubr.bf16.gmra.mxu0 %v422
      %v739 = vpop.f32.mrf.mxu0
      %v740 = vadd.f32 %v573, %v739
      %v741 = vpop.f32.mrf.mxu0
      %v742 = vpop.f32.mrf.mxu0
      %v743 = vadd.f32 %v576, %v742
      %v744 = vpop.f32.mrf.mxu0
      %745 = vmatprep.mubr.bf16.mxu0 0
      %746 = vmatmul.mubr.bf16.gmra.mxu0 %v425
      %v747 = vpop.f32.mrf.mxu0
      %v748 = vadd.f32 %v581, %v747
      %v749 = vpop.f32.mrf.mxu0
      %v750 = vpop.f32.mrf.mxu0
      %v751 = vadd.f32 %v584, %v750
      %v752 = vpop.f32.mrf.mxu0
      %753 = vmatprep.mubr.bf16.mxu0 0
      %754 = vmatmul.mubr.bf16.gmra.mxu0 %v428
      %v755 = vpop.f32.mrf.mxu0
      %v756 = vadd.f32 %v589, %v755
      %v757 = vpop.f32.mrf.mxu0
      %v758 = vpop.f32.mrf.mxu0
      %v759 = vadd.f32 %v592, %v758
      %v760 = vpop.f32.mrf.mxu0
      %761 = vmatprep.mubr.bf16.mxu0 0
      %762 = vmatmul.mubr.bf16.gmra.mxu0 %v431
      %v763 = vpop.f32.mrf.mxu0
      %v764 = vadd.f32 %v597, %v763
      %v765 = vpop.f32.mrf.mxu0
      %v766 = vpop.f32.mrf.mxu0
      %v767 = vadd.f32 %v600, %v766
      %v768 = vpop.f32.mrf.mxu0
      %769 = vmatprep.mubr.bf16.mxu0 0
      %770 = vmatmul.mubr.bf16.gmra.mxu0 %v434
      %v771 = vpop.f32.mrf.mxu0
      %v772 = vadd.f32 %v605, %v771
      %v773 = vpop.f32.mrf.mxu0
      %v774 = vpop.f32.mrf.mxu0
      %v775 = vadd.f32 %v608, %v774
      %v776 = vpop.f32.mrf.mxu0
      %777 = vmatprep.mubr.bf16.mxu0 0
      %778 = vmatmul.mubr.bf16.gmra.mxu0 %v437
      %v779 = vpop.f32.mrf.mxu0
      %v780 = vadd.f32 %v613, %v779
      %v781 = vpop.f32.mrf.mxu0
      %v782 = vpop.f32.mrf.mxu0
      %v783 = vadd.f32 %v616, %v782
      %v784 = vpop.f32.mrf.mxu0
      %785 = vmatprep.mubr.bf16.mxu0 0
      %786 = vmatmul.mubr.bf16.gmra.mxu0 %v440
      %v787 = vpop.f32.mrf.mxu0
      %v788 = vadd.f32 %v621, %v787
      %v789 = vpop.f32.mrf.mxu0
      %v790 = vpop.f32.mrf.mxu0
      %v791 = vadd.f32 %v624, %v790
      %v792 = vpop.f32.mrf.mxu0
      %793 = vdwg.mxu0
      %v794 = vld [vmem:[%s4] sm:$0x1]
      %v796 = vlaneseq
      %v797 = vshrl.u32 %v796, 7
      %v798 = vsub.s32 0, %v797
      %v799 = vrot.slane %v794, %v798
      %v801 = vadd.f32 %v668, %v799
      %v802 = vadd.f32 %v671, %v799
      %v803 = vadd.f32 %v676, %v799
      %v804 = vadd.f32 %v679, %v799
      %v805 = vadd.f32 %v684, %v799
      %v806 = vadd.f32 %v687, %v799
      %v807 = vadd.f32 %v692, %v799
      %v808 = vadd.f32 %v695, %v799
      %v809 = vadd.f32 %v700, %v799
      %v810 = vadd.f32 %v703, %v799
      %v811 = vadd.f32 %v708, %v799
      %v812 = vadd.f32 %v711, %v799
      %v813 = vadd.f32 %v716, %v799
      %v814 = vadd.f32 %v719, %v799
      %v815 = vadd.f32 %v724, %v799
      %v816 = vadd.f32 %v727, %v799
      %v817 = vadd.f32 %v732, %v799
      %v818 = vadd.f32 %v735, %v799
      %v819 = vadd.f32 %v740, %v799
      %v820 = vadd.f32 %v743, %v799
      %v821 = vadd.f32 %v748, %v799
      %v822 = vadd.f32 %v751, %v799
      %v823 = vadd.f32 %v756, %v799
      %v824 = vadd.f32 %v759, %v799
      %v825 = vadd.f32 %v764, %v799
      %v826 = vadd.f32 %v767, %v799
      %v827 = vadd.f32 %v772, %v799
      %v828 = vadd.f32 %v775, %v799
      %v829 = vadd.f32 %v780, %v799
      %v830 = vadd.f32 %v783, %v799
      %v831 = vadd.f32 %v788, %v799
      %v832 = vadd.f32 %v791, %v799
      %v833 = vmax.f32 %v801, 0.0
      %v834 = vmax.f32 %v802, 0.0
      %v835 = vmax.f32 %v803, 0.0
      %v836 = vmax.f32 %v804, 0.0
      %v837 = vmax.f32 %v805, 0.0
      %v838 = vmax.f32 %v806, 0.0
      %v839 = vmax.f32 %v807, 0.0
      %v840 = vmax.f32 %v808, 0.0
      %v841 = vmax.f32 %v809, 0.0
      %v842 = vmax.f32 %v810, 0.0
      %v843 = vmax.f32 %v811, 0.0
      %v844 = vmax.f32 %v812, 0.0
      %v845 = vmax.f32 %v813, 0.0
      %v846 = vmax.f32 %v814, 0.0
      %v847 = vmax.f32 %v815, 0.0
      %v848 = vmax.f32 %v816, 0.0
      %v849 = vmax.f32 %v817, 0.0
      %v850 = vmax.f32 %v818, 0.0
      %v851 = vmax.f32 %v819, 0.0
      %v852 = vmax.f32 %v820, 0.0
      %v853 = vmax.f32 %v821, 0.0
      %v854 = vmax.f32 %v822, 0.0
      %v855 = vmax.f32 %v823, 0.0
      %v856 = vmax.f32 %v824, 0.0
      %v857 = vmax.f32 %v825, 0.0
      %v858 = vmax.f32 %v826, 0.0
      %v859 = vmax.f32 %v827, 0.0
      %v860 = vmax.f32 %v828, 0.0
      %v861 = vmax.f32 %v829, 0.0
      %v862 = vmax.f32 %v830, 0.0
      %v863 = vmax.f32 %v831, 0.0
      %v864 = vmax.f32 %v832, 0.0
      %v865 = vpack.c.bf16 %v834, %v833
      %v866 = vpack.c.bf16 %v836, %v835
      %v867 = vpack.c.bf16 %v838, %v837
      %v868 = vpack.c.bf16 %v840, %v839
      %v869 = vpack.c.bf16 %v842, %v841
      %v870 = vpack.c.bf16 %v844, %v843
      %v871 = vpack.c.bf16 %v846, %v845
      %v872 = vpack.c.bf16 %v848, %v847
      %v873 = vpack.c.bf16 %v850, %v849
      %v874 = vpack.c.bf16 %v852, %v851
      %v875 = vpack.c.bf16 %v854, %v853
      %v876 = vpack.c.bf16 %v856, %v855
      %v877 = vpack.c.bf16 %v858, %v857
      %v878 = vpack.c.bf16 %v860, %v859
      %v879 = vpack.c.bf16 %v862, %v861
      %v880 = vpack.c.bf16 %v864, %v863
      %v881 = vld [vmem:[%s5] sm:$0xf]
      %v882 = vld [vmem:[%s5 + $0x4] sm:$0xf]
      %v883 = vld [vmem:[%s5 + $0x8] sm:$0xf]
      %v884 = vld [vmem:[%s5 + $0xc] sm:$0xf]
      %v885 = vld [vmem:[%s5 + $0x10] sm:$0xf]
      %v886 = vld [vmem:[%s5 + $0x14] sm:$0xf]
      %v887 = vld [vmem:[%s5 + $0x18] sm:$0xf]
      %v888 = vld [vmem:[%s5 + $0x1c] sm:$0xf]
      %v889 = vld [vmem:[%s6] sm:$0x1]
      %v891 = vlaneseq
      %v892 = vshrl.u32 %v891, 7
      %v893 = vsub.s32 0, %v892
      %v894 = vrot.slane %v889, %v893
      %v904 = vunpack.c.l.b16 %v881
      %v905 = vunpack.c.l.b16 %v882
      %v906 = vunpack.c.l.b16 %v883
      %v907 = vunpack.c.l.b16 %v884
      %v908 = vunpack.c.l.b16 %v885
      %v909 = vunpack.c.l.b16 %v886
      %v910 = vunpack.c.l.b16 %v887
      %v911 = vunpack.c.l.b16 %v888
      %v912 = vpack.c.b16 %v905, %v904
      %v913 = vpack.c.b16 %v907, %v906
      %v914 = vpack.c.b16 %v909, %v908
      %v915 = vpack.c.b16 %v911, %v910
      %vm920 = vcmask 523264
      %v922 = vsel %vm920, %v865, 0
      %v925 = vsel %vm920, %v866, 0
      %v928 = vsel %vm920, %v867, 0
      %v931 = vsel %vm920, %v868, 0
      %v934 = vsel %vm920, %v869, 0
      %v937 = vsel %vm920, %v870, 0
      %v940 = vsel %vm920, %v871, 0
      %v943 = vsel %vm920, %v872, 0
      %v946 = vsel %vm920, %v873, 0
      %v949 = vsel %vm920, %v874, 0
      %v952 = vsel %vm920, %v875, 0
      %v955 = vsel %vm920, %v876, 0
      %v958 = vsel %vm920, %v877, 0
      %v961 = vsel %vm920, %v878, 0
      %v964 = vsel %vm920, %v879, 0
      %v967 = vsel %vm920, %v880, 0
      %969 = vmatprep.subr.bf16.mxu0 0
      %970 = vmatpush1.bf16.msra.mxu0 0
      %971 = vmatprep.subr.bf16.mxu0 0
      %972 = vmatpush1.bf16.msra.mxu0 0
      %973 = vmatprep.subr.bf16.mxu0 0
      %974 = vmatpush1.bf16.msra.mxu0 0
      %975 = vmatprep.subr.bf16.mxu0 0
      %976 = vmatpush1.bf16.msra.mxu0 0
      %977 = vmatprep.subr.bf16.mxu0 0
      %978 = vmatpush1.bf16.msra.mxu0 %v915
      %979 = vmatprep.subr.bf16.mxu0 0
      %980 = vmatpush1.bf16.msra.mxu0 %v914
      %981 = vmatprep.subr.bf16.mxu0 0
      %982 = vmatpush1.bf16.msra.mxu0 %v913
      %983 = vmatprep.subr.bf16.mxu0 0
      %984 = vmatpush1.bf16.msra.mxu0 %v912
      %985 = vmatprep.subr.bf16.mxu0 0
      %986 = vmatpush2.bf16.msra.mxu0 0
      %987 = vmatprep.subr.bf16.mxu0 0
      %988 = vmatpush2.bf16.msra.mxu0 0
      %989 = vmatprep.subr.bf16.mxu0 0
      %990 = vmatpush2.bf16.msra.mxu0 0
      %991 = vmatprep.subr.bf16.mxu0 0
      %992 = vmatpush2.bf16.msra.mxu0 0
      %993 = vmatprep.subr.bf16.mxu0 0
      %994 = vmatpush2.bf16.msra.mxu0 0
      %995 = vmatprep.subr.bf16.mxu0 0
      %996 = vmatpush2.bf16.msra.mxu0 0
      %997 = vmatprep.subr.bf16.mxu0 0
      %998 = vmatpush2.bf16.msra.mxu0 0
      %999 = vmatprep.subr.bf16.mxu0 0
      %1000 = vmatpush2.bf16.msra.mxu0 0
      %1001 = vmatprep.mubr.bf16.mxu0 0
      %1002 = vmatmul.mubr.bf16.gmra.mxu0 %v922
      %v1003 = vpop.f32.mrf.mxu0
      %v1004 = vadd.f32 %v894, %v1003
      %v1005 = vpop.f32.mrf.mxu0
      %v1006 = vpop.f32.mrf.mxu0
      %v1007 = vadd.f32 %v894, %v1006
      %v1008 = vpop.f32.mrf.mxu0
      %1009 = vmatprep.mubr.bf16.mxu0 0
      %1010 = vmatmul.mubr.bf16.gmra.mxu0 %v925
      %v1011 = vpop.f32.mrf.mxu0
      %v1012 = vadd.f32 %v894, %v1011
      %v1013 = vpop.f32.mrf.mxu0
      %v1014 = vpop.f32.mrf.mxu0
      %v1015 = vadd.f32 %v894, %v1014
      %v1016 = vpop.f32.mrf.mxu0
      %1017 = vmatprep.mubr.bf16.mxu0 0
      %1018 = vmatmul.mubr.bf16.gmra.mxu0 %v928
      %v1019 = vpop.f32.mrf.mxu0
      %v1020 = vadd.f32 %v894, %v1019
      %v1021 = vpop.f32.mrf.mxu0
      %v1022 = vpop.f32.mrf.mxu0
      %v1023 = vadd.f32 %v894, %v1022
      %v1024 = vpop.f32.mrf.mxu0
      %1025 = vmatprep.mubr.bf16.mxu0 0
      %1026 = vmatmul.mubr.bf16.gmra.mxu0 %v931
      %v1027 = vpop.f32.mrf.mxu0
      %v1028 = vadd.f32 %v894, %v1027
      %v1029 = vpop.f32.mrf.mxu0
      %v1030 = vpop.f32.mrf.mxu0
      %v1031 = vadd.f32 %v894, %v1030
      %v1032 = vpop.f32.mrf.mxu0
      %1033 = vmatprep.mubr.bf16.mxu0 0
      %1034 = vmatmul.mubr.bf16.gmra.mxu0 %v934
      %v1035 = vpop.f32.mrf.mxu0
      %v1036 = vadd.f32 %v894, %v1035
      %v1037 = vpop.f32.mrf.mxu0
      %v1038 = vpop.f32.mrf.mxu0
      %v1039 = vadd.f32 %v894, %v1038
      %v1040 = vpop.f32.mrf.mxu0
      %1041 = vmatprep.mubr.bf16.mxu0 0
      %1042 = vmatmul.mubr.bf16.gmra.mxu0 %v937
      %v1043 = vpop.f32.mrf.mxu0
      %v1044 = vadd.f32 %v894, %v1043
      %v1045 = vpop.f32.mrf.mxu0
      %v1046 = vpop.f32.mrf.mxu0
      %v1047 = vadd.f32 %v894, %v1046
      %v1048 = vpop.f32.mrf.mxu0
      %1049 = vmatprep.mubr.bf16.mxu0 0
      %1050 = vmatmul.mubr.bf16.gmra.mxu0 %v940
      %v1051 = vpop.f32.mrf.mxu0
      %v1052 = vadd.f32 %v894, %v1051
      %v1053 = vpop.f32.mrf.mxu0
      %v1054 = vpop.f32.mrf.mxu0
      %v1055 = vadd.f32 %v894, %v1054
      %v1056 = vpop.f32.mrf.mxu0
      %1057 = vmatprep.mubr.bf16.mxu0 0
      %1058 = vmatmul.mubr.bf16.gmra.mxu0 %v943
      %v1059 = vpop.f32.mrf.mxu0
      %v1060 = vadd.f32 %v894, %v1059
      %v1061 = vpop.f32.mrf.mxu0
      %v1062 = vpop.f32.mrf.mxu0
      %v1063 = vadd.f32 %v894, %v1062
      %v1064 = vpop.f32.mrf.mxu0
      %1065 = vmatprep.mubr.bf16.mxu0 0
      %1066 = vmatmul.mubr.bf16.gmra.mxu0 %v946
      %v1067 = vpop.f32.mrf.mxu0
      %v1068 = vadd.f32 %v894, %v1067
      %v1069 = vpop.f32.mrf.mxu0
      %v1070 = vpop.f32.mrf.mxu0
      %v1071 = vadd.f32 %v894, %v1070
      %v1072 = vpop.f32.mrf.mxu0
      %1073 = vmatprep.mubr.bf16.mxu0 0
      %1074 = vmatmul.mubr.bf16.gmra.mxu0 %v949
      %v1075 = vpop.f32.mrf.mxu0
      %v1076 = vadd.f32 %v894, %v1075
      %v1077 = vpop.f32.mrf.mxu0
      %v1078 = vpop.f32.mrf.mxu0
      %v1079 = vadd.f32 %v894, %v1078
      %v1080 = vpop.f32.mrf.mxu0
      %1081 = vmatprep.mubr.bf16.mxu0 0
      %1082 = vmatmul.mubr.bf16.gmra.mxu0 %v952
      %v1083 = vpop.f32.mrf.mxu0
      %v1084 = vadd.f32 %v894, %v1083
      %v1085 = vpop.f32.mrf.mxu0
      %v1086 = vpop.f32.mrf.mxu0
      %v1087 = vadd.f32 %v894, %v1086
      %v1088 = vpop.f32.mrf.mxu0
      %1089 = vmatprep.mubr.bf16.mxu0 0
      %1090 = vmatmul.mubr.bf16.gmra.mxu0 %v955
      %v1091 = vpop.f32.mrf.mxu0
      %v1092 = vadd.f32 %v894, %v1091
      %v1093 = vpop.f32.mrf.mxu0
      %v1094 = vpop.f32.mrf.mxu0
      %v1095 = vadd.f32 %v894, %v1094
      %v1096 = vpop.f32.mrf.mxu0
      %1097 = vmatprep.mubr.bf16.mxu0 0
      %1098 = vmatmul.mubr.bf16.gmra.mxu0 %v958
      %v1099 = vpop.f32.mrf.mxu0
      %v1100 = vadd.f32 %v894, %v1099
      %v1101 = vpop.f32.mrf.mxu0
      %v1102 = vpop.f32.mrf.mxu0
      %v1103 = vadd.f32 %v894, %v1102
      %v1104 = vpop.f32.mrf.mxu0
      %1105 = vmatprep.mubr.bf16.mxu0 0
      %1106 = vmatmul.mubr.bf16.gmra.mxu0 %v961
      %v1107 = vpop.f32.mrf.mxu0
      %v1108 = vadd.f32 %v894, %v1107
      %v1109 = vpop.f32.mrf.mxu0
      %v1110 = vpop.f32.mrf.mxu0
      %v1111 = vadd.f32 %v894, %v1110
      %v1112 = vpop.f32.mrf.mxu0
      %1113 = vmatprep.mubr.bf16.mxu0 0
      %1114 = vmatmul.mubr.bf16.gmra.mxu0 %v964
      %v1115 = vpop.f32.mrf.mxu0
      %v1116 = vadd.f32 %v894, %v1115
      %v1117 = vpop.f32.mrf.mxu0
      %v1118 = vpop.f32.mrf.mxu0
      %v1119 = vadd.f32 %v894, %v1118
      %v1120 = vpop.f32.mrf.mxu0
      %1121 = vmatprep.mubr.bf16.mxu0 0
      %1122 = vmatmul.mubr.bf16.gmra.mxu0 %v967
      %v1123 = vpop.f32.mrf.mxu0
      %v1124 = vadd.f32 %v894, %v1123
      %v1125 = vpop.f32.mrf.mxu0
      %v1126 = vpop.f32.mrf.mxu0
      %v1127 = vadd.f32 %v894, %v1126
      %v1128 = vpop.f32.mrf.mxu0
      %1129 = vdwg.mxu0
      %v1130 = vmax.f32 %v1004, 0.0
      %v1131 = vmax.f32 %v1007, 0.0
      %v1132 = vmax.f32 %v1012, 0.0
      %v1133 = vmax.f32 %v1015, 0.0
      %v1134 = vmax.f32 %v1020, 0.0
      %v1135 = vmax.f32 %v1023, 0.0
      %v1136 = vmax.f32 %v1028, 0.0
      %v1137 = vmax.f32 %v1031, 0.0
      %v1138 = vmax.f32 %v1036, 0.0
      %v1139 = vmax.f32 %v1039, 0.0
      %v1140 = vmax.f32 %v1044, 0.0
      %v1141 = vmax.f32 %v1047, 0.0
      %v1142 = vmax.f32 %v1052, 0.0
      %v1143 = vmax.f32 %v1055, 0.0
      %v1144 = vmax.f32 %v1060, 0.0
      %v1145 = vmax.f32 %v1063, 0.0
      %v1146 = vmax.f32 %v1068, 0.0
      %v1147 = vmax.f32 %v1071, 0.0
      %v1148 = vmax.f32 %v1076, 0.0
      %v1149 = vmax.f32 %v1079, 0.0
      %v1150 = vmax.f32 %v1084, 0.0
      %v1151 = vmax.f32 %v1087, 0.0
      %v1152 = vmax.f32 %v1092, 0.0
      %v1153 = vmax.f32 %v1095, 0.0
      %v1154 = vmax.f32 %v1100, 0.0
      %v1155 = vmax.f32 %v1103, 0.0
      %v1156 = vmax.f32 %v1108, 0.0
      %v1157 = vmax.f32 %v1111, 0.0
      %v1158 = vmax.f32 %v1116, 0.0
      %v1159 = vmax.f32 %v1119, 0.0
      %v1160 = vmax.f32 %v1124, 0.0
      %v1161 = vmax.f32 %v1127, 0.0
      %v1162 = vpack.c.bf16 %v1131, %v1130
      %v1163 = vpack.c.bf16 %v1133, %v1132
      %v1164 = vpack.c.bf16 %v1135, %v1134
      %v1165 = vpack.c.bf16 %v1137, %v1136
      %v1166 = vpack.c.bf16 %v1139, %v1138
      %v1167 = vpack.c.bf16 %v1141, %v1140
      %v1168 = vpack.c.bf16 %v1143, %v1142
      %v1169 = vpack.c.bf16 %v1145, %v1144
      %v1170 = vpack.c.bf16 %v1147, %v1146
      %v1171 = vpack.c.bf16 %v1149, %v1148
      %v1172 = vpack.c.bf16 %v1151, %v1150
      %v1173 = vpack.c.bf16 %v1153, %v1152
      %v1174 = vpack.c.bf16 %v1155, %v1154
      %v1175 = vpack.c.bf16 %v1157, %v1156
      %v1176 = vpack.c.bf16 %v1159, %v1158
      %v1177 = vpack.c.bf16 %v1161, %v1160
      %v1178 = vld [vmem:[%s7] sm:$0xf]
      %v1179 = vld [vmem:[%s7 + $0x4] sm:$0xf]
      %v1180 = vld [vmem:[%s7 + $0x8] sm:$0xf]
      %v1181 = vld [vmem:[%s7 + $0xc] sm:$0xf]
      %v1182 = vld [vmem:[%s7 + $0x10] sm:$0xf]
      %v1183 = vld [vmem:[%s7 + $0x14] sm:$0xf]
      %v1184 = vld [vmem:[%s7 + $0x18] sm:$0xf]
      %v1185 = vld [vmem:[%s7 + $0x1c] sm:$0xf]
      %v1186 = vld [vmem:[%s8] sm:$0x1]
      %v1188 = vlaneseq
      %v1189 = vshrl.u32 %v1188, 7
      %v1190 = vsub.s32 0, %v1189
      %v1191 = vrot.slane %v1186, %v1190
      %v1201 = vunpack.c.l.b16 %v1178
      %v1202 = vunpack.c.l.b16 %v1179
      %v1203 = vunpack.c.l.b16 %v1180
      %v1204 = vunpack.c.l.b16 %v1181
      %v1205 = vunpack.c.l.b16 %v1182
      %v1206 = vunpack.c.l.b16 %v1183
      %v1207 = vunpack.c.l.b16 %v1184
      %v1208 = vunpack.c.l.b16 %v1185
      %v1209 = vpack.c.b16 %v1202, %v1201
      %v1210 = vpack.c.b16 %v1204, %v1203
      %v1211 = vpack.c.b16 %v1206, %v1205
      %v1212 = vpack.c.b16 %v1208, %v1207
      %v1218 = vsel %vm920, %v1162, 0
      %v1221 = vsel %vm920, %v1163, 0
      %v1224 = vsel %vm920, %v1164, 0
      %v1227 = vsel %vm920, %v1165, 0
      %v1230 = vsel %vm920, %v1166, 0
      %v1233 = vsel %vm920, %v1167, 0
      %v1236 = vsel %vm920, %v1168, 0
      %v1239 = vsel %vm920, %v1169, 0
      %v1242 = vsel %vm920, %v1170, 0
      %v1245 = vsel %vm920, %v1171, 0
      %v1248 = vsel %vm920, %v1172, 0
      %v1251 = vsel %vm920, %v1173, 0
      %v1254 = vsel %vm920, %v1174, 0
      %v1257 = vsel %vm920, %v1175, 0
      %v1260 = vsel %vm920, %v1176, 0
      %v1263 = vsel %vm920, %v1177, 0
      %1265 = vmatprep.subr.bf16.mxu0 0
      %1266 = vmatpush1.bf16.msra.mxu0 0
      %1267 = vmatprep.subr.bf16.mxu0 0
      %1268 = vmatpush1.bf16.msra.mxu0 0
      %1269 = vmatprep.subr.bf16.mxu0 0
      %1270 = vmatpush1.bf16.msra.mxu0 0
      %1271 = vmatprep.subr.bf16.mxu0 0
      %1272 = vmatpush1.bf16.msra.mxu0 0
      %1273 = vmatprep.subr.bf16.mxu0 0
      %1274 = vmatpush1.bf16.msra.mxu0 %v1212
      %1275 = vmatprep.subr.bf16.mxu0 0
      %1276 = vmatpush1.bf16.msra.mxu0 %v1211
      %1277 = vmatprep.subr.bf16.mxu0 0
      %1278 = vmatpush1.bf16.msra.mxu0 %v1210
      %1279 = vmatprep.subr.bf16.mxu0 0
      %1280 = vmatpush1.bf16.msra.mxu0 %v1209
      %1281 = vmatprep.subr.bf16.mxu0 0
      %1282 = vmatpush2.bf16.msra.mxu0 0
      %1283 = vmatprep.subr.bf16.mxu0 0
      %1284 = vmatpush2.bf16.msra.mxu0 0
      %1285 = vmatprep.subr.bf16.mxu0 0
      %1286 = vmatpush2.bf16.msra.mxu0 0
      %1287 = vmatprep.subr.bf16.mxu0 0
      %1288 = vmatpush2.bf16.msra.mxu0 0
      %1289 = vmatprep.subr.bf16.mxu0 0
      %1290 = vmatpush2.bf16.msra.mxu0 0
      %1291 = vmatprep.subr.bf16.mxu0 0
      %1292 = vmatpush2.bf16.msra.mxu0 0
      %1293 = vmatprep.subr.bf16.mxu0 0
      %1294 = vmatpush2.bf16.msra.mxu0 0
      %1295 = vmatprep.subr.bf16.mxu0 0
      %1296 = vmatpush2.bf16.msra.mxu0 0
      %1297 = vmatprep.mubr.bf16.mxu0 0
      %1298 = vmatmul.mubr.bf16.gmra.mxu0 %v1218
      %v1299 = vpop.f32.mrf.mxu0
      %v1300 = vadd.f32 %v1191, %v1299
      %v1301 = vpop.f32.mrf.mxu0
      %v1302 = vpop.f32.mrf.mxu0
      %v1303 = vadd.f32 %v1191, %v1302
      %v1304 = vpop.f32.mrf.mxu0
      %1305 = vmatprep.mubr.bf16.mxu0 0
      %1306 = vmatmul.mubr.bf16.gmra.mxu0 %v1221
      %v1307 = vpop.f32.mrf.mxu0
      %v1308 = vadd.f32 %v1191, %v1307
      %v1309 = vpop.f32.mrf.mxu0
      %v1310 = vpop.f32.mrf.mxu0
      %v1311 = vadd.f32 %v1191, %v1310
      %v1312 = vpop.f32.mrf.mxu0
      %1313 = vmatprep.mubr.bf16.mxu0 0
      %1314 = vmatmul.mubr.bf16.gmra.mxu0 %v1224
      %v1315 = vpop.f32.mrf.mxu0
      %v1316 = vadd.f32 %v1191, %v1315
      %v1317 = vpop.f32.mrf.mxu0
      %v1318 = vpop.f32.mrf.mxu0
      %v1319 = vadd.f32 %v1191, %v1318
      %v1320 = vpop.f32.mrf.mxu0
      %1321 = vmatprep.mubr.bf16.mxu0 0
      %1322 = vmatmul.mubr.bf16.gmra.mxu0 %v1227
      %v1323 = vpop.f32.mrf.mxu0
      %v1324 = vadd.f32 %v1191, %v1323
      %v1325 = vpop.f32.mrf.mxu0
      %v1326 = vpop.f32.mrf.mxu0
      %v1327 = vadd.f32 %v1191, %v1326
      %v1328 = vpop.f32.mrf.mxu0
      %1329 = vmatprep.mubr.bf16.mxu0 0
      %1330 = vmatmul.mubr.bf16.gmra.mxu0 %v1230
      %v1331 = vpop.f32.mrf.mxu0
      %v1332 = vadd.f32 %v1191, %v1331
      %v1333 = vpop.f32.mrf.mxu0
      %v1334 = vpop.f32.mrf.mxu0
      %v1335 = vadd.f32 %v1191, %v1334
      %v1336 = vpop.f32.mrf.mxu0
      %1337 = vmatprep.mubr.bf16.mxu0 0
      %1338 = vmatmul.mubr.bf16.gmra.mxu0 %v1233
      %v1339 = vpop.f32.mrf.mxu0
      %v1340 = vadd.f32 %v1191, %v1339
      %v1341 = vpop.f32.mrf.mxu0
      %v1342 = vpop.f32.mrf.mxu0
      %v1343 = vadd.f32 %v1191, %v1342
      %v1344 = vpop.f32.mrf.mxu0
      %1345 = vmatprep.mubr.bf16.mxu0 0
      %1346 = vmatmul.mubr.bf16.gmra.mxu0 %v1236
      %v1347 = vpop.f32.mrf.mxu0
      %v1348 = vadd.f32 %v1191, %v1347
      %v1349 = vpop.f32.mrf.mxu0
      %v1350 = vpop.f32.mrf.mxu0
      %v1351 = vadd.f32 %v1191, %v1350
      %v1352 = vpop.f32.mrf.mxu0
      %1353 = vmatprep.mubr.bf16.mxu0 0
      %1354 = vmatmul.mubr.bf16.gmra.mxu0 %v1239
      %v1355 = vpop.f32.mrf.mxu0
      %v1356 = vadd.f32 %v1191, %v1355
      %v1357 = vpop.f32.mrf.mxu0
      %v1358 = vpop.f32.mrf.mxu0
      %v1359 = vadd.f32 %v1191, %v1358
      %v1360 = vpop.f32.mrf.mxu0
      %1361 = vmatprep.mubr.bf16.mxu0 0
      %1362 = vmatmul.mubr.bf16.gmra.mxu0 %v1242
      %v1363 = vpop.f32.mrf.mxu0
      %v1364 = vadd.f32 %v1191, %v1363
      %v1365 = vpop.f32.mrf.mxu0
      %v1366 = vpop.f32.mrf.mxu0
      %v1367 = vadd.f32 %v1191, %v1366
      %v1368 = vpop.f32.mrf.mxu0
      %1369 = vmatprep.mubr.bf16.mxu0 0
      %1370 = vmatmul.mubr.bf16.gmra.mxu0 %v1245
      %v1371 = vpop.f32.mrf.mxu0
      %v1372 = vadd.f32 %v1191, %v1371
      %v1373 = vpop.f32.mrf.mxu0
      %v1374 = vpop.f32.mrf.mxu0
      %v1375 = vadd.f32 %v1191, %v1374
      %v1376 = vpop.f32.mrf.mxu0
      %1377 = vmatprep.mubr.bf16.mxu0 0
      %1378 = vmatmul.mubr.bf16.gmra.mxu0 %v1248
      %v1379 = vpop.f32.mrf.mxu0
      %v1380 = vadd.f32 %v1191, %v1379
      %v1381 = vpop.f32.mrf.mxu0
      %v1382 = vpop.f32.mrf.mxu0
      %v1383 = vadd.f32 %v1191, %v1382
      %v1384 = vpop.f32.mrf.mxu0
      %1385 = vmatprep.mubr.bf16.mxu0 0
      %1386 = vmatmul.mubr.bf16.gmra.mxu0 %v1251
      %v1387 = vpop.f32.mrf.mxu0
      %v1388 = vadd.f32 %v1191, %v1387
      %v1389 = vpop.f32.mrf.mxu0
      %v1390 = vpop.f32.mrf.mxu0
      %v1391 = vadd.f32 %v1191, %v1390
      %v1392 = vpop.f32.mrf.mxu0
      %1393 = vmatprep.mubr.bf16.mxu0 0
      %1394 = vmatmul.mubr.bf16.gmra.mxu0 %v1254
      %v1395 = vpop.f32.mrf.mxu0
      %v1396 = vadd.f32 %v1191, %v1395
      %v1397 = vpop.f32.mrf.mxu0
      %v1398 = vpop.f32.mrf.mxu0
      %v1399 = vadd.f32 %v1191, %v1398
      %v1400 = vpop.f32.mrf.mxu0
      %1401 = vmatprep.mubr.bf16.mxu0 0
      %1402 = vmatmul.mubr.bf16.gmra.mxu0 %v1257
      %v1403 = vpop.f32.mrf.mxu0
      %v1404 = vadd.f32 %v1191, %v1403
      %v1405 = vpop.f32.mrf.mxu0
      %v1406 = vpop.f32.mrf.mxu0
      %v1407 = vadd.f32 %v1191, %v1406
      %v1408 = vpop.f32.mrf.mxu0
      %1409 = vmatprep.mubr.bf16.mxu0 0
      %1410 = vmatmul.mubr.bf16.gmra.mxu0 %v1260
      %v1411 = vpop.f32.mrf.mxu0
      %v1412 = vadd.f32 %v1191, %v1411
      %v1413 = vpop.f32.mrf.mxu0
      %v1414 = vpop.f32.mrf.mxu0
      %v1415 = vadd.f32 %v1191, %v1414
      %v1416 = vpop.f32.mrf.mxu0
      %1417 = vmatprep.mubr.bf16.mxu0 0
      %1418 = vmatmul.mubr.bf16.gmra.mxu0 %v1263
      %v1419 = vpop.f32.mrf.mxu0
      %v1420 = vadd.f32 %v1191, %v1419
      %v1421 = vpop.f32.mrf.mxu0
      %v1422 = vpop.f32.mrf.mxu0
      %v1423 = vadd.f32 %v1191, %v1422
      %v1424 = vpop.f32.mrf.mxu0
      %1425 = vdwg.mxu0
      %v1426 = vmax.f32 %v1300, 0.0
      %v1427 = vmax.f32 %v1303, 0.0
      %v1428 = vmax.f32 %v1308, 0.0
      %v1429 = vmax.f32 %v1311, 0.0
      %v1430 = vmax.f32 %v1316, 0.0
      %v1431 = vmax.f32 %v1319, 0.0
      %v1432 = vmax.f32 %v1324, 0.0
      %v1433 = vmax.f32 %v1327, 0.0
      %v1434 = vmax.f32 %v1332, 0.0
      %v1435 = vmax.f32 %v1335, 0.0
      %v1436 = vmax.f32 %v1340, 0.0
      %v1437 = vmax.f32 %v1343, 0.0
      %v1438 = vmax.f32 %v1348, 0.0
      %v1439 = vmax.f32 %v1351, 0.0
      %v1440 = vmax.f32 %v1356, 0.0
      %v1441 = vmax.f32 %v1359, 0.0
      %v1442 = vmax.f32 %v1364, 0.0
      %v1443 = vmax.f32 %v1367, 0.0
      %v1444 = vmax.f32 %v1372, 0.0
      %v1445 = vmax.f32 %v1375, 0.0
      %v1446 = vmax.f32 %v1380, 0.0
      %v1447 = vmax.f32 %v1383, 0.0
      %v1448 = vmax.f32 %v1388, 0.0
      %v1449 = vmax.f32 %v1391, 0.0
      %v1450 = vmax.f32 %v1396, 0.0
      %v1451 = vmax.f32 %v1399, 0.0
      %v1452 = vmax.f32 %v1404, 0.0
      %v1453 = vmax.f32 %v1407, 0.0
      %v1454 = vmax.f32 %v1412, 0.0
      %v1455 = vmax.f32 %v1415, 0.0
      %v1456 = vmax.f32 %v1420, 0.0
      %v1457 = vmax.f32 %v1423, 0.0
      %1474 = vrot.lane.b32.xlu0 %v399, 16
      %v1475 = vpop.permute.xlu0 %1474
      %1476 = vrot.lane.b32.xlu0 %v400, 16
      %v1477 = vpop.permute.xlu0 %1476
      %1478 = vrot.lane.b32.xlu0 %v401, 16
      %v1479 = vpop.permute.xlu0 %1478
      %1480 = vrot.lane.b32.xlu0 %v402, 16
      %v1481 = vpop.permute.xlu0 %1480
      %1482 = vrot.lane.b32.xlu0 %v403, 16
      %v1483 = vpop.permute.xlu0 %1482
      %1484 = vrot.lane.b32.xlu0 %v404, 16
      %v1485 = vpop.permute.xlu0 %1484
      %1486 = vrot.lane.b32.xlu0 %v405, 16
      %v1487 = vpop.permute.xlu0 %1486
      %1488 = vrot.lane.b32.xlu0 %v406, 16
      %v1489 = vpop.permute.xlu0 %1488
      %1490 = vrot.lane.b32.xlu0 %v375, 16
      %v1491 = vpop.permute.xlu0 %1490
      %1492 = vrot.lane.b32.xlu0 %v376, 16
      %v1493 = vpop.permute.xlu0 %1492
      %1494 = vrot.lane.b32.xlu0 %v377, 16
      %v1495 = vpop.permute.xlu0 %1494
      %1496 = vrot.lane.b32.xlu0 %v378, 16
      %v1497 = vpop.permute.xlu0 %1496
      %1498 = vrot.lane.b32.xlu0 %v379, 16
      %v1499 = vpop.permute.xlu0 %1498
      %1500 = vrot.lane.b32.xlu0 %v380, 16
      %v1501 = vpop.permute.xlu0 %1500
      %1502 = vrot.lane.b32.xlu0 %v381, 16
      %v1503 = vpop.permute.xlu0 %1502
      %1504 = vrot.lane.b32.xlu0 %v382, 16
      %v1505 = vpop.permute.xlu0 %1504
      %v1507 = vsel %vm417, %v375, %v1475
      %v1510 = vsel %vm417, %v376, %v1477
      %v1513 = vsel %vm417, %v377, %v1479
      %v1516 = vsel %vm417, %v378, %v1481
      %v1519 = vsel %vm417, %v379, %v1483
      %v1522 = vsel %vm417, %v380, %v1485
      %v1525 = vsel %vm417, %v381, %v1487
      %v1528 = vsel %vm417, %v382, %v1489
      %v1531 = vsel %vm417, %v399, %v1491
      %v1534 = vsel %vm417, %v400, %v1493
      %v1537 = vsel %vm417, %v401, %v1495
      %v1540 = vsel %vm417, %v402, %v1497
      %v1543 = vsel %vm417, %v403, %v1499
      %v1546 = vsel %vm417, %v404, %v1501
      %v1549 = vsel %vm417, %v405, %v1503
      %v1552 = vsel %vm417, %v406, %v1505
      %v1554 = vunpack.c.l.bf16 %v1507
      %v1555 = vunpack.c.h.bf16 %v1507
      %v1556 = vunpack.c.l.bf16 %v1510
      %v1557 = vunpack.c.h.bf16 %v1510
      %v1558 = vunpack.c.l.bf16 %v1513
      %v1559 = vunpack.c.h.bf16 %v1513
      %v1560 = vunpack.c.l.bf16 %v1516
      %v1561 = vunpack.c.h.bf16 %v1516
      %v1562 = vunpack.c.l.bf16 %v1519
      %v1563 = vunpack.c.h.bf16 %v1519
      %v1564 = vunpack.c.l.bf16 %v1522
      %v1565 = vunpack.c.h.bf16 %v1522
      %v1566 = vunpack.c.l.bf16 %v1525
      %v1567 = vunpack.c.h.bf16 %v1525
      %v1568 = vunpack.c.l.bf16 %v1528
      %v1569 = vunpack.c.h.bf16 %v1528
      %v1570 = vunpack.c.l.bf16 %v1531
      %v1571 = vunpack.c.h.bf16 %v1531
      %v1572 = vunpack.c.l.bf16 %v1534
      %v1573 = vunpack.c.h.bf16 %v1534
      %v1574 = vunpack.c.l.bf16 %v1537
      %v1575 = vunpack.c.h.bf16 %v1537
      %v1576 = vunpack.c.l.bf16 %v1540
      %v1577 = vunpack.c.h.bf16 %v1540
      %v1578 = vunpack.c.l.bf16 %v1543
      %v1579 = vunpack.c.h.bf16 %v1543
      %v1580 = vunpack.c.l.bf16 %v1546
      %v1581 = vunpack.c.h.bf16 %v1546
      %v1582 = vunpack.c.l.bf16 %v1549
      %v1583 = vunpack.c.h.bf16 %v1549
      %v1584 = vunpack.c.l.bf16 %v1552
      %v1585 = vunpack.c.h.bf16 %v1552
      %v1586 = vadd.f32 %v1554, %v1426
      %v1587 = vadd.f32 %v1555, %v1427
      %v1588 = vadd.f32 %v1556, %v1428
      %v1589 = vadd.f32 %v1557, %v1429
      %v1590 = vadd.f32 %v1558, %v1430
      %v1591 = vadd.f32 %v1559, %v1431
      %v1592 = vadd.f32 %v1560, %v1432
      %v1593 = vadd.f32 %v1561, %v1433
      %v1594 = vadd.f32 %v1562, %v1434
      %v1595 = vadd.f32 %v1563, %v1435
      %v1596 = vadd.f32 %v1564, %v1436
      %v1597 = vadd.f32 %v1565, %v1437
      %v1598 = vadd.f32 %v1566, %v1438
      %v1599 = vadd.f32 %v1567, %v1439
      %v1600 = vadd.f32 %v1568, %v1440
      %v1601 = vadd.f32 %v1569, %v1441
      %v1602 = vadd.f32 %v1570, %v1442
      %v1603 = vadd.f32 %v1571, %v1443
      %v1604 = vadd.f32 %v1572, %v1444
      %v1605 = vadd.f32 %v1573, %v1445
      %v1606 = vadd.f32 %v1574, %v1446
      %v1607 = vadd.f32 %v1575, %v1447
      %v1608 = vadd.f32 %v1576, %v1448
      %v1609 = vadd.f32 %v1577, %v1449
      %v1610 = vadd.f32 %v1578, %v1450
      %v1611 = vadd.f32 %v1579, %v1451
      %v1612 = vadd.f32 %v1580, %v1452
      %v1613 = vadd.f32 %v1581, %v1453
      %v1614 = vadd.f32 %v1582, %v1454
      %v1615 = vadd.f32 %v1583, %v1455
      %v1616 = vadd.f32 %v1584, %v1456
      %v1617 = vadd.f32 %v1585, %v1457
      %v1618 = vmul.f32 %v1586, 0.5
      %v1619 = vmul.f32 %v1587, 0.5
      %v1620 = vmul.f32 %v1588, 0.5
      %v1621 = vmul.f32 %v1589, 0.5
      %v1622 = vmul.f32 %v1590, 0.5
      %v1623 = vmul.f32 %v1591, 0.5
      %v1624 = vmul.f32 %v1592, 0.5
      %v1625 = vmul.f32 %v1593, 0.5
      %v1626 = vmul.f32 %v1594, 0.5
      %v1627 = vmul.f32 %v1595, 0.5
      %v1628 = vmul.f32 %v1596, 0.5
      %v1629 = vmul.f32 %v1597, 0.5
      %v1630 = vmul.f32 %v1598, 0.5
      %v1631 = vmul.f32 %v1599, 0.5
      %v1632 = vmul.f32 %v1600, 0.5
      %v1633 = vmul.f32 %v1601, 0.5
      %v1634 = vmul.f32 %v1602, 0.5
      %v1635 = vmul.f32 %v1603, 0.5
      %v1636 = vmul.f32 %v1604, 0.5
      %v1637 = vmul.f32 %v1605, 0.5
      %v1638 = vmul.f32 %v1606, 0.5
      %v1639 = vmul.f32 %v1607, 0.5
      %v1640 = vmul.f32 %v1608, 0.5
      %v1641 = vmul.f32 %v1609, 0.5
      %v1642 = vmul.f32 %v1610, 0.5
      %v1643 = vmul.f32 %v1611, 0.5
      %v1644 = vmul.f32 %v1612, 0.5
      %v1645 = vmul.f32 %v1613, 0.5
      %v1646 = vmul.f32 %v1614, 0.5
      %v1647 = vmul.f32 %v1615, 0.5
      %v1648 = vmul.f32 %v1616, 0.5
      %v1649 = vmul.f32 %v1617, 0.5
      %v1650 = vadd.f32 %v1618, %v1634
      %v1651 = vadd.f32 %v1619, %v1635
      %v1652 = vadd.f32 %v1620, %v1636
      %v1653 = vadd.f32 %v1621, %v1637
      %v1654 = vadd.f32 %v1622, %v1638
      %v1655 = vadd.f32 %v1623, %v1639
      %v1656 = vadd.f32 %v1624, %v1640
      %v1657 = vadd.f32 %v1625, %v1641
      %v1658 = vadd.f32 %v1626, %v1642
      %v1659 = vadd.f32 %v1627, %v1643
      %v1660 = vadd.f32 %v1628, %v1644
      %v1661 = vadd.f32 %v1629, %v1645
      %v1662 = vadd.f32 %v1630, %v1646
      %v1663 = vadd.f32 %v1631, %v1647
      %v1664 = vadd.f32 %v1632, %v1648
      %v1665 = vadd.f32 %v1633, %v1649
      %v1666 = vmul.f32 %v1650, 0.5
      %v1667 = vmul.f32 %v1651, 0.5
      %v1668 = vmul.f32 %v1652, 0.5
      %v1669 = vmul.f32 %v1653, 0.5
      %v1670 = vmul.f32 %v1654, 0.5
      %v1671 = vmul.f32 %v1655, 0.5
      %v1672 = vmul.f32 %v1656, 0.5
      %v1673 = vmul.f32 %v1657, 0.5
      %v1674 = vmul.f32 %v1658, 0.5
      %v1675 = vmul.f32 %v1659, 0.5
      %v1676 = vmul.f32 %v1660, 0.5
      %v1677 = vmul.f32 %v1661, 0.5
      %v1678 = vmul.f32 %v1662, 0.5
      %v1679 = vmul.f32 %v1663, 0.5
      %v1680 = vmul.f32 %v1664, 0.5
      %v1681 = vmul.f32 %v1665, 0.5
      %vm1682 = vcmask 261120
      %1683 = vst.msk [vmem:[%s356] sm:$0xff] %vm1682, %v1666
      %1684 = vst.msk [vmem:[%s356 + $0x8] sm:$0xff] %vm1682, %v1667
      %1685 = vst.msk [vmem:[%s356 + $0x10] sm:$0xff] %vm1682, %v1668
      %1686 = vst.msk [vmem:[%s356 + $0x18] sm:$0xff] %vm1682, %v1669
      %1687 = vst.msk [vmem:[%s356 + $0x20] sm:$0xff] %vm1682, %v1670
      %1688 = vst.msk [vmem:[%s356 + $0x28] sm:$0xff] %vm1682, %v1671
      %1689 = vst.msk [vmem:[%s356 + $0x30] sm:$0xff] %vm1682, %v1672
      %1690 = vst.msk [vmem:[%s356 + $0x38] sm:$0xff] %vm1682, %v1673
      %1691 = vst.msk [vmem:[%s356 + $0x40] sm:$0xff] %vm1682, %v1674
      %1692 = vst.msk [vmem:[%s356 + $0x48] sm:$0xff] %vm1682, %v1675
      %1693 = vst.msk [vmem:[%s356 + $0x50] sm:$0xff] %vm1682, %v1676
      %1694 = vst.msk [vmem:[%s356 + $0x58] sm:$0xff] %vm1682, %v1677
      %1695 = vst.msk [vmem:[%s356 + $0x60] sm:$0xff] %vm1682, %v1678
      %1696 = vst.msk [vmem:[%s356 + $0x68] sm:$0xff] %vm1682, %v1679
      %1697 = vst.msk [vmem:[%s356 + $0x70] sm:$0xff] %vm1682, %v1680
      %1698 = vst.msk [vmem:[%s356 + $0x78] sm:$0xff] %vm1682, %v1681
      %s1699 = smul.u32 16, %s20
      %p1700 = scmp.lt.s32.totalorder %s1699, 31
      %s1701 = scalar_select %p1700, %s1699, 31
      %s1702 = smul.addr %s1701, 8
      %s1703 = scalar_lea.vmem %s9, %s1702
      // Predicated region
      $region57: #{node_to_edge_feat.1} parent=55 // pred_check
        %p1704 = pneg %p237
      $region58: #{node_to_edge_feat.1} parent=55 // pred_check_branch
        %1706 = sbr.rel (%p1704) target = $region60
      $region59: #{node_to_edge_feat.1} parent=55 // pred_region
        %s1707 = smul.u32 16, %s20
      $region60: #{node_to_edge_feat.1} parent=55 // pred_fallthru
        _
    $region56: #{node_to_edge_feat.1} parent=5 // pred_fallthru
      _
    %p1708 = scmp.le.s32.totalorder 2, %s15
    // Predicated region
    $region61: #{node_to_edge_feat.1} parent=5 // pred_check
      %p1709 = pneg %p1708
    $region62: #{node_to_edge_feat.1} parent=5 // pred_check_branch
      %1711 = sbr.rel (%p1709) target = $region64
    $region63: #{node_to_edge_feat.1} parent=5 // pred_region
      %s1712 = ssub.s32 %s15, 2
      // Predicated region
      $region65: #{node_to_edge_feat.1} parent=63 // pred_check
        %p1713 = pneg %p243
      $region66: #{node_to_edge_feat.1} parent=63 // pred_check_branch
        %1715 = sbr.rel (%p1713) target = $region68
      $region67: #{node_to_edge_feat.1} parent=63 // pred_region
        %s1716 = smul.u32 16, %s21
        %p1717 = scmp.lt.s32.totalorder %s1716, 31
        %s1718 = scalar_select %p1717, %s1716, 31
        %s1719 = smul.addr %s1718, 8
        %s1720 = scalar_lea.vmem %s9, %s1719
      $region68: #{node_to_edge_feat.1} parent=63 // pred_fallthru
        _
    $region64: #{node_to_edge_feat.1} parent=5 // pred_fallthru
      _
  $region6: #{node_to_edge_feat.1} parent=0 // loop_footer
    %s19 = sadd.s32 1, %s15
  $region7: #{node_to_edge_feat.1} parent=0 // loop_footer_branch
    %14 = sbr.rel target = $region3
  $region8: #{node_to_edge_feat.1} parent=0 // loop_exit
    _

</llo_original>
